<compile_context>
chip_gen: v5e
topology: v5e:2x2
jax: 0.10.0
libtpu: 0.0.40
codegen_flags: <defaults>
</compile_context>

<pallas_src>
import functools

import jax
import jax.numpy as jnp
from jax.experimental import pallas as pl
from jax.experimental.pallas import tpu as pltpu

EPS = 1e-5  # nn.LayerNorm default


def _vmem_limit_bytes():
    """Per-generation scoped-VMEM budget: ~3/4 of physical, capped at 100 MiB."""
    try:
        cap = pltpu.get_tpu_info().vmem_capacity_bytes
        return int(min(cap * 3 // 4, 100 * 1024 * 1024))
    except Exception:
        return 48 * 1024 * 1024  # safe on v5e/v6e (128 MiB) and v7x (64 MiB)


def _layer_norm(x, w, b):
    mu = jnp.mean(x, axis=-1, keepdims=True)
    var = jnp.mean((x - mu) ** 2, axis=-1, keepdims=True)
    return (x - mu) * jax.lax.rsqrt(var + EPS) * w + b


# ---------------------------------------------------------------------------
# Kernel 1: all transformer layers + final LayerNorm fused in one pallas_call.
#   grid = (L,) ("arbitrary"): the (B*S, D) activation lives in a VMEM scratch
#   across the whole layer sweep; weights stream from HBM once per forward and
#   the activation touches HBM once in (f32) and once out (bf16).
# ---------------------------------------------------------------------------
def transformer_stack_kernel(x_ref, ln1w_ref, ln1b_ref, wqkv_ref, bqkv_ref,
                             wo_ref, bo_ref, ln2w_ref, ln2b_ref,
                             w1_ref, b1_ref, w2_ref, b2_ref,
                             lnf_w_ref, lnf_b_ref,
                             o_ref, x_scr, *, n_heads, batch):
    layer = pl.program_id(0)
    n_layers = pl.num_programs(0)

    @pl.when(layer == 0)
    def _():
        x_scr[...] = x_ref[...].astype(jnp.float32)

    x = x_scr[...]                     # (M, D) resident f32 activation, M = B*S
    M, D = x.shape
    S = M // batch
    dh = D // n_heads

    def to_heads(m2d):                 # (M, D) -> (B*H, S, dh), bf16 for the MXU
        t = jnp.swapaxes(m2d.reshape(batch, S, n_heads, dh), 1, 2)
        return t.reshape(batch * n_heads, S, dh).astype(jnp.bfloat16)

    # ---- pre-LN multi-head causal self-attention (all heads batched) ----
    h = _layer_norm(x, ln1w_ref[0], ln1b_ref[0])
    # fused (M, D) @ (D, 3D) bf16 MXU pass for Q, K, V; the 1/sqrt(dh) scale is
    # pre-folded into the Q columns of w_qkv / b_qkv by the host-side prep.
    qkv = jnp.dot(h.astype(jnp.bfloat16), wqkv_ref[0],
                  preferred_element_type=jnp.float32) + bqkv_ref[0]
    q = to_heads(qkv[:, :D])
    k = to_heads(qkv[:, D:2 * D])
    v = to_heads(qkv[:, 2 * D:])

    s = jnp.einsum('nqd,nkd->nqk', q, k,
                   preferred_element_type=jnp.float32)          # (B*H, S, S) f32
    row = jax.lax.broadcasted_iota(jnp.int32, (S, S), 0)
    col = jax.lax.broadcasted_iota(jnp.int32, (S, S), 1)
    s = jnp.where((row >= col)[None], s, -1e9)                  # causal mask
    s = s - jnp.max(s, axis=-1, keepdims=True)
    p = jnp.exp(s)                                              # f32 softmax
    p = p * pl.reciprocal(jnp.sum(p, axis=-1, keepdims=True), approx=True)
    av = jnp.einsum('nqk,nkd->nqd', p.astype(jnp.bfloat16), v,
                    preferred_element_type=jnp.float32)         # (B*H, S, dh)
    # (B*H, S, dh) -> (M, D), then a single full-K output projection on the MXU
    av = jnp.swapaxes(av.reshape(batch, n_heads, S, dh), 1, 2).reshape(M, D)
    attn = jnp.dot(av.astype(jnp.bfloat16), wo_ref[0],
                   preferred_element_type=jnp.float32) + bo_ref[0]
    x = x + attn                                    # residual (dropout = eval no-op)

    # ---- pre-LN feed-forward (GELU) ----
    h2 = _layer_norm(x, ln2w_ref[0], ln2b_ref[0])
    ff = jnp.dot(h2.astype(jnp.bfloat16), w1_ref[0],
                 preferred_element_type=jnp.float32) + b1_ref[0]
    ff = jax.nn.gelu(ff)   # TODO(synk): tanh approx; PyTorch nn.GELU default is erf
    ff = jnp.dot(ff.astype(jnp.bfloat16), w2_ref[0],
                 preferred_element_type=jnp.float32) + b2_ref[0]
    x = x + ff

    x_scr[...] = x                                  # carry to next layer

    @pl.when(layer == n_layers - 1)
    def _():
        # fused final LayerNorm -> the LM head becomes a pure streaming matmul,
        # and the inter-kernel activation crosses HBM in bf16.
        xn = _layer_norm(x, lnf_w_ref[...], lnf_b_ref[...])
        o_ref[...] = xn.astype(o_ref.dtype)


# ---------------------------------------------------------------------------
# Kernel 2: tied LM head — pure (tm, D) @ (D, tv) bf16 matmul, tiled over both
# the row (B*S) and vocab dimensions; tv is a multiple of 128 so stores are
# lane-dense, and the embedding arrives pre-transposed (D, V).
# ---------------------------------------------------------------------------
def lm_head_kernel(x_ref, embt_ref, o_ref):
    o_ref[...] = jnp.dot(x_ref[...], embt_ref[...],
                         preferred_element_type=jnp.float32).astype(o_ref.dtype)


# ---------------------------------------------------------------------------
# pallas_call wrappers
# ---------------------------------------------------------------------------
def run_stack(x2d, stack, lnf_w, lnf_b, *, n_heads, batch):
    M, D = x2d.shape
    L = stack['ln1_w'].shape[0]
    weights = [stack['ln1_w'], stack['ln1_b'], stack['w_qkv'], stack['b_qkv'],
               stack['wo'], stack['bo'], stack['ln2_w'], stack['ln2_b'],
               stack['w1'], stack['b1'], stack['w2'], stack['b2']]

    def wspec(a):
        nd = a.ndim
        return pl.BlockSpec((1,) + a.shape[1:],
                            lambda l, _nd=nd: (l,) + (0,) * (_nd - 1))

    return pl.pallas_call(
        functools.partial(transformer_stack_kernel, n_heads=n_heads, batch=batch),
        out_shape=jax.ShapeDtypeStruct((M, D), jnp.bfloat16),
        grid=(L,),
        in_specs=[pl.BlockSpec((M, D), lambda l: (0, 0))]
                 + [wspec(a) for a in weights]
                 + [pl.BlockSpec((1, D), lambda l: (0, 0)),
                    pl.BlockSpec((1, D), lambda l: (0, 0))],
        out_specs=pl.BlockSpec((M, D), lambda l: (0, 0)),
        scratch_shapes=[pltpu.VMEM((M, D), jnp.float32)],
        compiler_params=pltpu.CompilerParams(
            dimension_semantics=("arbitrary",),
            vmem_limit_bytes=_vmem_limit_bytes()),
    )(x2d, *weights, lnf_w, lnf_b)


def _vocab_tile(V, cap=1024):
    """Largest multiple of 128 (<= cap) dividing V, else the full V."""
    c = min(cap, V) - (min(cap, V) % 128)
    while c >= 128:
        if V % c == 0:
            return c
        c -= 128
    return V


def _m_tile(M, cap=256):
    """Largest multiple of 8 (<= cap) dividing M, else the full M."""
    if M <= cap:
        return M
    t = cap - (cap % 8)
    while t >= 8:
        if M % t == 0:
            return t
        t -= 8
    return M


def run_head(x2d_bf16, emb_t):
    M, D = x2d_bf16.shape
    V = emb_t.shape[1]
    tv = _vocab_tile(V)
    tm = _m_tile(M)
    return pl.pallas_call(
        lm_head_kernel,
        out_shape=jax.ShapeDtypeStruct((M, V), jnp.float32),
        grid=(M // tm, V // tv),
        in_specs=[pl.BlockSpec((tm, D), lambda i, j: (i, 0)),
                  pl.BlockSpec((D, tv), lambda i, j: (0, j))],
        out_specs=pl.BlockSpec((tm, tv), lambda i, j: (i, j)),
        compiler_params=pltpu.CompilerParams(
            dimension_semantics=("parallel", "parallel"),
            vmem_limit_bytes=_vmem_limit_bytes()),
    )(x2d_bf16, emb_t)


# ---------------------------------------------------------------------------
# Parameters / glue
# ---------------------------------------------------------------------------
def make_positional_embedding(max_len, d_model):
    pos = jnp.arange(max_len, dtype=jnp.float32)[:, None]
    i = jnp.arange(0, d_model, 2, dtype=jnp.float32)
    div = jnp.exp(-i * (jnp.log(10000.0) / d_model))
    ang = pos * div[None, :]
    pe = jnp.zeros((max_len, d_model), jnp.float32)
    pe = pe.at[:, 0::2].set(jnp.sin(ang))
    pe = pe.at[:, 1::2].set(jnp.cos(ang))
    return pe


def init_params(key, vocab, d_model, n_layers, d_ff, max_len):
    """Canonical f32 parameters matching the PyTorch module layout."""
    std = 0.02
    keys = jax.random.split(key, 1 + n_layers)
    emb = jax.random.normal(keys[0], (vocab, d_model), jnp.float32) * std

    def nrm(k, shape):
        return jax.random.normal(k, shape, jnp.float32) * std

    layers = []
    for li in range(n_layers):
        ks = jax.random.split(keys[1 + li], 6)
        wq = nrm(ks[0], (d_model, d_model))
        wk = nrm(ks[1], (d_model, d_model))
        wv = nrm(ks[2], (d_model, d_model))
        layers.append(dict(
            ln1_w=jnp.ones((1, d_model)), ln1_b=jnp.zeros((1, d_model)),
            w_qkv=jnp.concatenate([wq, wk, wv], axis=1),     # fused (D, 3D)
            b_qkv=jnp.zeros((1, 3 * d_model)),
            wo=nrm(ks[3], (d_model, d_model)), bo=jnp.zeros((1, d_model)),
            ln2_w=jnp.ones((1, d_model)), ln2_b=jnp.zeros((1, d_model)),
            w1=nrm(ks[4], (d_model, d_ff)), b1=jnp.zeros((1, d_ff)),
            w2=nrm(ks[5], (d_ff, d_model)), b2=jnp.zeros((1, d_model)),
        ))
    stack = {k: jnp.stack([lyr[k] for lyr in layers]) for k in layers[0]}
    return dict(emb=emb,
                pos=make_positional_embedding(max_len, d_model),
                lnf_w=jnp.ones((1, d_model)), lnf_b=jnp.zeros((1, d_model)),
                stack=stack)


def prepare_inference_params(params, n_heads):
    """One-time host-side prep: bf16 weights for the MXU, 1/sqrt(dh) folded into
    the Q projection, tied embedding pre-transposed to (D, V) bf16."""
    st = params['stack']
    D = params['emb'].shape[1]
    scale = 1.0 / ((D // n_heads) ** 0.5)
    w_qkv = st['w_qkv'].at[:, :, :D].multiply(scale)
    b_qkv = st['b_qkv'].at[:, :, :D].multiply(scale)
    stack = dict(
        ln1_w=st['ln1_w'], ln1_b=st['ln1_b'],
        w_qkv=w_qkv.astype(jnp.bfloat16), b_qkv=b_qkv,
        wo=st['wo'].astype(jnp.bfloat16), bo=st['bo'],
        ln2_w=st['ln2_w'], ln2_b=st['ln2_b'],
        w1=st['w1'].astype(jnp.bfloat16), b1=st['b1'],
        w2=st['w2'].astype(jnp.bfloat16), b2=st['b2'],
    )
    return dict(emb=params['emb'], pos=params['pos'],
                lnf_w=params['lnf_w'], lnf_b=params['lnf_b'],
                emb_t=params['emb'].T.astype(jnp.bfloat16),   # (D, V), built once
                stack=stack)


def transformer_forward(input_ids, prep, n_heads):
    # TODO(synk): optional attention_mask / return_hidden_states not implemented.
    B, S = input_ids.shape
    D = prep['emb'].shape[1]
    x = prep['emb'][input_ids] + prep['pos'][None, :S, :]       # glue: gather + pos
    x2d = x.reshape(B * S, D)
    h = run_stack(x2d, prep['stack'], prep['lnf_w'], prep['lnf_b'],
                  n_heads=n_heads, batch=B)                     # (B*S, D) bf16, LN'd
    logits2d = run_head(h, prep['emb_t'])                       # (B*S, V) f32
    return logits2d.reshape(B, S, -1)


# ---------------------------------------------------------------------------
# Pure-JAX reference (for validation; uses the canonical f32 params)
# ---------------------------------------------------------------------------
def reference_forward(input_ids, params, n_heads):
    B, S = input_ids.shape
    x = params['emb'][input_ids] + params['pos'][None, :S, :]
    st = params['stack']
    L = st['ln1_w'].shape[0]
    causal = jnp.tril(jnp.ones((S, S), bool))

    def ln(x, w, b):
        mu = x.mean(-1, keepdims=True)
        var = ((x - mu) ** 2).mean(-1, keepdims=True)
        return (x - mu) / jnp.sqrt(var + EPS) * w + b

    D = x.shape[-1]
    dh = D // n_heads
    for li in range(L):
        h = ln(x, st['ln1_w'][li, 0], st['ln1_b'][li, 0])
        qkv = h @ st['w_qkv'][li] + st['b_qkv'][li, 0]
        q, k, v = qkv[..., :D], qkv[..., D:2 * D], qkv[..., 2 * D:]
        q = q.reshape(B, S, n_heads, dh).transpose(0, 2, 1, 3)
        k = k.reshape(B, S, n_heads, dh).transpose(0, 2, 1, 3)
        v = v.reshape(B, S, n_heads, dh).transpose(0, 2, 1, 3)
        s = jnp.einsum('bhqd,bhkd->bhqk', q, k) / jnp.sqrt(dh)
        s = jnp.where(causal[None, None], s, -1e9)
        a = jax.nn.softmax(s, -1)
        o = jnp.einsum('bhqk,bhkd->bhqd', a, v).transpose(0, 2, 1, 3).reshape(B, S, D)
        x = x + (o @ st['wo'][li] + st['bo'][li, 0])
        h2 = ln(x, st['ln2_w'][li, 0], st['ln2_b'][li, 0])
        ff = jax.nn.gelu(h2 @ st['w1'][li] + st['b1'][li, 0])
        x = x + (ff @ st['w2'][li] + st['b2'][li, 0])
    h = ln(x, params['lnf_w'][0], params['lnf_b'][0])
    return h @ params['emb'].T


# ---------------------------------------------------------------------------
if __name__ == "__main__":
    VOCAB, D_MODEL, N_HEADS, D_FF, N_LAYERS, MAX_LEN = 128, 32, 4, 64, 2, 64
    B, S = 2, 8

    key = jax.random.PRNGKey(0)
    pkey, dkey = jax.random.split(key)
    params = init_params(pkey, VOCAB, D_MODEL, N_LAYERS, D_FF, MAX_LEN)
    prep = prepare_inference_params(params, N_HEADS)
    input_ids = jax.random.randint(dkey, (B, S), 0, VOCAB, dtype=jnp.int32)

    logits = transformer_forward(input_ids, prep, N_HEADS)
    logits = jax.block_until_ready(logits)

    ref = reference_forward(input_ids, params, N_HEADS)
    assert logits.shape == (B, S, VOCAB), logits.shape
    max_err = float(jnp.max(jnp.abs(logits - ref)))
    # bf16 MXU inputs + approx reciprocal in softmax -> looser tolerance than f32
    assert jnp.allclose(logits, ref, atol=2e-2, rtol=2e-2), max_err

    print("KERNEL_OK")
</pallas_src>

<mosaic_0001>
module attributes {stable_mosaic.version = 11 : i64} {
  func.func @transformer_stack_kernel(%arg0: i32, %arg1: memref<16x32xf32, #tpu.memory_space<vmem>>, %arg2: memref<1x1x32xf32, #tpu.memory_space<vmem>>, %arg3: memref<1x1x32xf32, #tpu.memory_space<vmem>>, %arg4: memref<1x32x96xbf16, #tpu.memory_space<vmem>>, %arg5: memref<1x1x96xf32, #tpu.memory_space<vmem>>, %arg6: memref<1x32x32xbf16, #tpu.memory_space<vmem>>, %arg7: memref<1x1x32xf32, #tpu.memory_space<vmem>>, %arg8: memref<1x1x32xf32, #tpu.memory_space<vmem>>, %arg9: memref<1x1x32xf32, #tpu.memory_space<vmem>>, %arg10: memref<1x32x64xbf16, #tpu.memory_space<vmem>>, %arg11: memref<1x1x64xf32, #tpu.memory_space<vmem>>, %arg12: memref<1x64x32xbf16, #tpu.memory_space<vmem>>, %arg13: memref<1x1x32xf32, #tpu.memory_space<vmem>>, %arg14: memref<1x32xf32, #tpu.memory_space<vmem>>, %arg15: memref<1x32xf32, #tpu.memory_space<vmem>>, %arg16: memref<16x32xbf16, #tpu.memory_space<vmem>>, %arg17: memref<16x32xf32, #tpu.memory_space<vmem>>) attributes {dimension_semantics = [#tpu.dimension_semantics<arbitrary>], iteration_bounds = array<i64: 2>, scalar_prefetch = 0 : i64, scratch_operands = 1 : i64, tpu.core_type = #tpu.core_type<tc>, window_params = [{pipeline_mode = #tpu.pipeline_mode<synchronous>, transform_indices = @transform_0, window_bounds = array<i64: 16, 32>}, {transform_indices = @transform_1, window_bounds = array<i64: 1, 1, 32>}, {transform_indices = @transform_2, window_bounds = array<i64: 1, 1, 32>}, {transform_indices = @transform_3, window_bounds = array<i64: 1, 32, 96>}, {transform_indices = @transform_4, window_bounds = array<i64: 1, 1, 96>}, {transform_indices = @transform_5, window_bounds = array<i64: 1, 32, 32>}, {transform_indices = @transform_6, window_bounds = array<i64: 1, 1, 32>}, {transform_indices = @transform_7, window_bounds = array<i64: 1, 1, 32>}, {transform_indices = @transform_8, window_bounds = array<i64: 1, 1, 32>}, {transform_indices = @transform_9, window_bounds = array<i64: 1, 32, 64>}, {transform_indices = @transform_10, window_bounds = array<i64: 1, 1, 64>}, {transform_indices = @transform_11, window_bounds = array<i64: 1, 64, 32>}, {transform_indices = @transform_12, window_bounds = array<i64: 1, 1, 32>}, {pipeline_mode = #tpu.pipeline_mode<synchronous>, transform_indices = @transform_13, window_bounds = array<i64: 1, 32>}, {pipeline_mode = #tpu.pipeline_mode<synchronous>, transform_indices = @transform_14, window_bounds = array<i64: 1, 32>}, {pipeline_mode = #tpu.pipeline_mode<synchronous>, transform_indices = @transform_15, window_bounds = array<i64: 16, 32>}]} {
    %c0_i32 = arith.constant 0 : i32
    %0 = arith.cmpi eq, %arg0, %c0_i32 : i32
    %1 = arith.extui %0 : i1 to i32
    %c0_i32_0 = arith.constant 0 : i32
    %2 = arith.cmpi ne, %1, %c0_i32_0 : i32
    scf.if %2 {
      %c0_63 = arith.constant 0 : index
      %c0_64 = arith.constant 0 : index
      %146 = vector.load %arg1[%c0_63, %c0_64] : memref<16x32xf32, #tpu.memory_space<vmem>>, vector<16x32xf32>
      %c0_65 = arith.constant 0 : index
      %c0_66 = arith.constant 0 : index
      %147 = vector.load %arg17[%c0_65, %c0_66] : memref<16x32xf32, #tpu.memory_space<vmem>>, vector<16x32xf32>
      tpu.vector_store %arg17[%c0_65, %c0_66], %146 {strides = array<i32>} : memref<16x32xf32, #tpu.memory_space<vmem>>, vector<16x32xf32>,
    } else {
    }
    %c0 = arith.constant 0 : index
    %c0_1 = arith.constant 0 : index
    %3 = vector.load %arg17[%c0, %c0_1] : memref<16x32xf32, #tpu.memory_space<vmem>>, vector<16x32xf32>
    %c0_2 = arith.constant 0 : index
    %c0_3 = arith.constant 0 : index
    %c0_4 = arith.constant 0 : index
    %4 = vector.load %arg2[%c0_2, %c0_3, %c0_4] : memref<1x1x32xf32, #tpu.memory_space<vmem>>, vector<1x1x32xf32>
    %5 = vector.shape_cast %4 : vector<1x1x32xf32> to vector<1x32xf32>
    %c0_5 = arith.constant 0 : index
    %c0_6 = arith.constant 0 : index
    %c0_7 = arith.constant 0 : index
    %6 = vector.load %arg3[%c0_5, %c0_6, %c0_7] : memref<1x1x32xf32, #tpu.memory_space<vmem>>, vector<1x1x32xf32>
    %7 = vector.shape_cast %6 : vector<1x1x32xf32> to vector<1x32xf32>
    %cst = arith.constant dense<0.000000e+00> : vector<16xf32>
    %8 = vector.multi_reduction <add>, %3, %cst [1] : vector<16x32xf32> to vector<16xf32>
    %9 = vector.shape_cast %8 : vector<16xf32> to vector<16x1xf32>
    %cst_8 = arith.constant 3.200000e+01 : f32
    %10 = vector.broadcast %cst_8 : f32 to vector<16x1xf32>
    %11 = arith.divf %9, %10 : vector<16x1xf32>
    %12 = vector.broadcast %11 : vector<16x1xf32> to vector<16x32xf32>
    %13 = arith.subf %3, %12 : vector<16x32xf32>
    %14 = arith.mulf %13, %13 : vector<16x32xf32>
    %cst_9 = arith.constant dense<0.000000e+00> : vector<16xf32>
    %15 = vector.multi_reduction <add>, %14, %cst_9 [1] : vector<16x32xf32> to vector<16xf32>
    %16 = vector.shape_cast %15 : vector<16xf32> to vector<16x1xf32>
    %cst_10 = arith.constant 3.200000e+01 : f32
    %17 = vector.broadcast %cst_10 : f32 to vector<16x1xf32>
    %18 = arith.divf %16, %17 : vector<16x1xf32>
    %19 = vector.broadcast %11 : vector<16x1xf32> to vector<16x32xf32>
    %20 = arith.subf %3, %19 : vector<16x32xf32>
    %cst_11 = arith.constant 9.99999974E-6 : f32
    %21 = vector.broadcast %cst_11 : f32 to vector<16x1xf32>
    %22 = arith.addf %18, %21 : vector<16x1xf32>
    %23 = math.rsqrt %22 : vector<16x1xf32>
    %24 = vector.broadcast %23 : vector<16x1xf32> to vector<16x32xf32>
    %25 = arith.mulf %20, %24 : vector<16x32xf32>
    %26 = vector.broadcast %5 : vector<1x32xf32> to vector<16x32xf32>
    %27 = arith.mulf %25, %26 : vector<16x32xf32>
    %28 = vector.broadcast %7 : vector<1x32xf32> to vector<16x32xf32>
    %29 = arith.addf %27, %28 : vector<16x32xf32>
    %30 = arith.truncf %29 : vector<16x32xf32> to vector<16x32xbf16>
    %c0_12 = arith.constant 0 : index
    %c0_13 = arith.constant 0 : index
    %c0_14 = arith.constant 0 : index
    %31 = vector.load %arg4[%c0_12, %c0_13, %c0_14] : memref<1x32x96xbf16, #tpu.memory_space<vmem>>, vector<1x32x96xbf16>
    %32 = vector.shape_cast %31 : vector<1x32x96xbf16> to vector<32x96xbf16>
    %cst_15 = arith.constant dense<0.000000e+00> : vector<16x96xf32>
    %33 = tpu.matmul %30, %32, %cst_15 {dimension_numbers = #tpu.dot_dimension_numbers<[1], [0], [0], [1], [0, 0, 1, 1], [], []>} : vector<16x32xbf16>, vector<32x96xbf16>, vector<16x96xf32> -> vector<16x96xf32>
    %c0_16 = arith.constant 0 : index
    %c0_17 = arith.constant 0 : index
    %c0_18 = arith.constant 0 : index
    %34 = vector.load %arg5[%c0_16, %c0_17, %c0_18] : memref<1x1x96xf32, #tpu.memory_space<vmem>>, vector<1x1x96xf32>
    %35 = vector.shape_cast %34 : vector<1x1x96xf32> to vector<1x96xf32>
    %36 = vector.broadcast %35 : vector<1x96xf32> to vector<16x96xf32>
    %37 = arith.addf %33, %36 : vector<16x96xf32>
    %38 = vector.extract_strided_slice %37 {offsets = [0, 0], sizes = [16, 32], strides = [1, 1]} : vector<16x96xf32> to vector<16x32xf32>
    %39 = vector.shape_cast %38 : vector<16x32xf32> to vector<2x8x4x8xf32>
    %40 = tpu.transpose %39, [0, 2, 1, 3] : vector<2x8x4x8xf32> -> vector<2x4x8x8xf32>
    %41 = vector.shape_cast %40 : vector<2x4x8x8xf32> to vector<8x8x8xf32>
    %42 = arith.truncf %41 : vector<8x8x8xf32> to vector<8x8x8xbf16>
    %43 = vector.extract_strided_slice %37 {offsets = [0, 32], sizes = [16, 32], strides = [1, 1]} : vector<16x96xf32> to vector<16x32xf32>
    %44 = vector.shape_cast %43 : vector<16x32xf32> to vector<2x8x4x8xf32>
    %45 = tpu.transpose %44, [0, 2, 1, 3] : vector<2x8x4x8xf32> -> vector<2x4x8x8xf32>
    %46 = vector.shape_cast %45 : vector<2x4x8x8xf32> to vector<8x8x8xf32>
    %47 = arith.truncf %46 : vector<8x8x8xf32> to vector<8x8x8xbf16>
    %48 = vector.extract_strided_slice %37 {offsets = [0, 64], sizes = [16, 32], strides = [1, 1]} : vector<16x96xf32> to vector<16x32xf32>
    %49 = vector.shape_cast %48 : vector<16x32xf32> to vector<2x8x4x8xf32>
    %50 = tpu.transpose %49, [0, 2, 1, 3] : vector<2x8x4x8xf32> -> vector<2x4x8x8xf32>
    %51 = vector.shape_cast %50 : vector<2x4x8x8xf32> to vector<8x8x8xf32>
    %52 = arith.truncf %51 : vector<8x8x8xf32> to vector<8x8x8xbf16>
    "tpu.trace_start"() <{level = 10 : i32, message = "nqd,nkd->nqk"}> : () -> ()
    %cst_19 = arith.constant dense<0.000000e+00> : vector<8x8x8xf32>
    %53 = tpu.matmul %42, %47, %cst_19 {dimension_numbers = #tpu.dot_dimension_numbers<[2], [2], [1], [1], [0, 0, 0, 1, 1, 1], [0], [0]>} : vector<8x8x8xbf16>, vector<8x8x8xbf16>, vector<8x8x8xf32> -> vector<8x8x8xf32>
    "tpu.trace_stop"() : () -> ()
    %54 = tpu.iota {dimensions = array<i32: 0>} : vector<8x8xi32>
    %55 = tpu.iota {dimensions = array<i32: 1>} : vector<8x8xi32>
    %56 = arith.cmpi sge, %54, %55 : vector<8x8xi32>
    %57 = vector.shape_cast %56 : vector<8x8xi1> to vector<1x8x8xi1>
    %cst_20 = arith.constant -1.000000e+09 : f32
    %58 = vector.shape_cast %57 : vector<1x8x8xi1> to vector<1x8x8xi1>
    %59 = vector.broadcast %58 : vector<1x8x8xi1> to vector<8x8x8xi1>
    %60 = vector.broadcast %cst_20 : f32 to vector<8x8x8xf32>
    %61 = arith.select %59, %53, %60 : vector<8x8x8xi1>, vector<8x8x8xf32>
    %cst_21 = arith.constant dense<0xFF800000> : vector<8x8xf32>
    %62 = vector.multi_reduction <maximumf>, %61, %cst_21 [2] : vector<8x8x8xf32> to vector<8x8xf32>
    %63 = vector.shape_cast %62 : vector<8x8xf32> to vector<8x8x1xf32>
    %64 = vector.broadcast %63 : vector<8x8x1xf32> to vector<8x8x8xf32>
    %65 = arith.subf %61, %64 : vector<8x8x8xf32>
    %66 = math.exp %65 : vector<8x8x8xf32>
    %cst_22 = arith.constant dense<0.000000e+00> : vector<8x8xf32>
    %67 = vector.multi_reduction <add>, %66, %cst_22 [2] : vector<8x8x8xf32> to vector<8x8xf32>
    %68 = vector.shape_cast %67 : vector<8x8xf32> to vector<8x8x1xf32>
    %69 = tpu.reciprocal %68 {approx = true} : vector<8x8x1xf32> -> vector<8x8x1xf32>
    %70 = vector.broadcast %69 : vector<8x8x1xf32> to vector<8x8x8xf32>
    %71 = arith.mulf %66, %70 : vector<8x8x8xf32>
    %72 = arith.truncf %71 : vector<8x8x8xf32> to vector<8x8x8xbf16>
    "tpu.trace_start"() <{level = 10 : i32, message = "nqk,nkd->nqd"}> : () -> ()
    %cst_23 = arith.constant dense<0.000000e+00> : vector<8x8x8xf32>
    %73 = tpu.matmul %72, %52, %cst_23 {dimension_numbers = #tpu.dot_dimension_numbers<[2], [1], [1], [2], [0, 0, 0, 1, 1, 2], [0], [0]>} : vector<8x8x8xbf16>, vector<8x8x8xbf16>, vector<8x8x8xf32> -> vector<8x8x8xf32>
    "tpu.trace_stop"() : () -> ()
    %74 = vector.shape_cast %73 : vector<8x8x8xf32> to vector<2x4x8x8xf32>
    %75 = tpu.transpose %74, [0, 2, 1, 3] : vector<2x4x8x8xf32> -> vector<2x8x4x8xf32>
    %76 = vector.shape_cast %75 : vector<2x8x4x8xf32> to vector<16x32xf32>
    %77 = arith.truncf %76 : vector<16x32xf32> to vector<16x32xbf16>
    %c0_24 = arith.constant 0 : index
    %c0_25 = arith.constant 0 : index
    %c0_26 = arith.constant 0 : index
    %78 = vector.load %arg6[%c0_24, %c0_25, %c0_26] : memref<1x32x32xbf16, #tpu.memory_space<vmem>>, vector<1x32x32xbf16>
    %79 = vector.shape_cast %78 : vector<1x32x32xbf16> to vector<32x32xbf16>
    %cst_27 = arith.constant dense<0.000000e+00> : vector<16x32xf32>
    %80 = tpu.matmul %77, %79, %cst_27 {dimension_numbers = #tpu.dot_dimension_numbers<[1], [0], [0], [1], [0, 0, 1, 1], [], []>} : vector<16x32xbf16>, vector<32x32xbf16>, vector<16x32xf32> -> vector<16x32xf32>
    %c0_28 = arith.constant 0 : index
    %c0_29 = arith.constant 0 : index
    %c0_30 = arith.constant 0 : index
    %81 = vector.load %arg7[%c0_28, %c0_29, %c0_30] : memref<1x1x32xf32, #tpu.memory_space<vmem>>, vector<1x1x32xf32>
    %82 = vector.shape_cast %81 : vector<1x1x32xf32> to vector<1x32xf32>
    %83 = vector.broadcast %82 : vector<1x32xf32> to vector<16x32xf32>
    %84 = arith.addf %80, %83 : vector<16x32xf32>
    %85 = arith.addf %3, %84 : vector<16x32xf32>
    %c0_31 = arith.constant 0 : index
    %c0_32 = arith.constant 0 : index
    %c0_33 = arith.constant 0 : index
    %86 = vector.load %arg8[%c0_31, %c0_32, %c0_33] : memref<1x1x32xf32, #tpu.memory_space<vmem>>, vector<1x1x32xf32>
    %87 = vector.shape_cast %86 : vector<1x1x32xf32> to vector<1x32xf32>
    %c0_34 = arith.constant 0 : index
    %c0_35 = arith.constant 0 : index
    %c0_36 = arith.constant 0 : index
    %88 = vector.load %arg9[%c0_34, %c0_35, %c0_36] : memref<1x1x32xf32, #tpu.memory_space<vmem>>, vector<1x1x32xf32>
    %89 = vector.shape_cast %88 : vector<1x1x32xf32> to vector<1x32xf32>
    %cst_37 = arith.constant dense<0.000000e+00> : vector<16xf32>
    %90 = vector.multi_reduction <add>, %85, %cst_37 [1] : vector<16x32xf32> to vector<16xf32>
    %91 = vector.shape_cast %90 : vector<16xf32> to vector<16x1xf32>
    %cst_38 = arith.constant 3.200000e+01 : f32
    %92 = vector.broadcast %cst_38 : f32 to vector<16x1xf32>
    %93 = arith.divf %91, %92 : vector<16x1xf32>
    %94 = vector.broadcast %93 : vector<16x1xf32> to vector<16x32xf32>
    %95 = arith.subf %85, %94 : vector<16x32xf32>
    %96 = arith.mulf %95, %95 : vector<16x32xf32>
    %cst_39 = arith.constant dense<0.000000e+00> : vector<16xf32>
    %97 = vector.multi_reduction <add>, %96, %cst_39 [1] : vector<16x32xf32> to vector<16xf32>
    %98 = vector.shape_cast %97 : vector<16xf32> to vector<16x1xf32>
    %cst_40 = arith.constant 3.200000e+01 : f32
    %99 = vector.broadcast %cst_40 : f32 to vector<16x1xf32>
    %100 = arith.divf %98, %99 : vector<16x1xf32>
    %101 = vector.broadcast %93 : vector<16x1xf32> to vector<16x32xf32>
    %102 = arith.subf %85, %101 : vector<16x32xf32>
    %cst_41 = arith.constant 9.99999974E-6 : f32
    %103 = vector.broadcast %cst_41 : f32 to vector<16x1xf32>
    %104 = arith.addf %100, %103 : vector<16x1xf32>
    %105 = math.rsqrt %104 : vector<16x1xf32>
    %106 = vector.broadcast %105 : vector<16x1xf32> to vector<16x32xf32>
    %107 = arith.mulf %102, %106 : vector<16x32xf32>
    %108 = vector.broadcast %87 : vector<1x32xf32> to vector<16x32xf32>
    %109 = arith.mulf %107, %108 : vector<16x32xf32>
    %110 = vector.broadcast %89 : vector<1x32xf32> to vector<16x32xf32>
    %111 = arith.addf %109, %110 : vector<16x32xf32>
    %112 = arith.truncf %111 : vector<16x32xf32> to vector<16x32xbf16>
    %c0_42 = arith.constant 0 : index
    %c0_43 = arith.constant 0 : index
    %c0_44 = arith.constant 0 : index
    %113 = vector.load %arg10[%c0_42, %c0_43, %c0_44] : memref<1x32x64xbf16, #tpu.memory_space<vmem>>, vector<1x32x64xbf16>
    %114 = vector.shape_cast %113 : vector<1x32x64xbf16> to vector<32x64xbf16>
    %cst_45 = arith.constant dense<0.000000e+00> : vector<16x64xf32>
    %115 = tpu.matmul %112, %114, %cst_45 {dimension_numbers = #tpu.dot_dimension_numbers<[1], [0], [0], [1], [0, 0, 1, 1], [], []>} : vector<16x32xbf16>, vector<32x64xbf16>, vector<16x64xf32> -> vector<16x64xf32>
    %c0_46 = arith.constant 0 : index
    %c0_47 = arith.constant 0 : index
    %c0_48 = arith.constant 0 : index
    %116 = vector.load %arg11[%c0_46, %c0_47, %c0_48] : memref<1x1x64xf32, #tpu.memory_space<vmem>>, vector<1x1x64xf32>
    %117 = vector.shape_cast %116 : vector<1x1x64xf32> to vector<1x64xf32>
    %118 = vector.broadcast %117 : vector<1x64xf32> to vector<16x64xf32>
    %119 = arith.addf %115, %118 : vector<16x64xf32>
    %120 = arith.mulf %119, %119 : vector<16x64xf32>
    %121 = arith.mulf %119, %120 : vector<16x64xf32>
    %cst_49 = arith.constant 4.471500e-02 : f32
    %122 = vector.broadcast %cst_49 : f32 to vector<16x64xf32>
    %123 = arith.mulf %122, %121 : vector<16x64xf32>
    %124 = arith.addf %119, %123 : vector<16x64xf32>
    %cst_50 = arith.constant 0.797884583 : f32
    %125 = vector.broadcast %cst_50 : f32 to vector<16x64xf32>
    %126 = arith.mulf %125, %124 : vector<16x64xf32>
    %127 = math.tanh %126 : vector<16x64xf32>
    %cst_51 = arith.constant 1.000000e+00 : f32
    %128 = vector.broadcast %cst_51 : f32 to vector<16x64xf32>
    %129 = arith.addf %128, %127 : vector<16x64xf32>
    %cst_52 = arith.constant 5.000000e-01 : f32
    %130 = vector.broadcast %cst_52 : f32 to vector<16x64xf32>
    %131 = arith.mulf %130, %129 : vector<16x64xf32>
    %132 = arith.mulf %119, %131 : vector<16x64xf32>
    %133 = arith.truncf %132 : vector<16x64xf32> to vector<16x64xbf16>
    %c0_53 = arith.constant 0 : index
    %c0_54 = arith.constant 0 : index
    %c0_55 = arith.constant 0 : index
    %134 = vector.load %arg12[%c0_53, %c0_54, %c0_55] : memref<1x64x32xbf16, #tpu.memory_space<vmem>>, vector<1x64x32xbf16>
    %135 = vector.shape_cast %134 : vector<1x64x32xbf16> to vector<64x32xbf16>
    %cst_56 = arith.constant dense<0.000000e+00> : vector<16x32xf32>
    %136 = tpu.matmul %133, %135, %cst_56 {dimension_numbers = #tpu.dot_dimension_numbers<[1], [0], [0], [1], [0, 0, 1, 1], [], []>} : vector<16x64xbf16>, vector<64x32xbf16>, vector<16x32xf32> -> vector<16x32xf32>
    %c0_57 = arith.constant 0 : index
    %c0_58 = arith.constant 0 : index
    %c0_59 = arith.constant 0 : index
    %137 = vector.load %arg13[%c0_57, %c0_58, %c0_59] : memref<1x1x32xf32, #tpu.memory_space<vmem>>, vector<1x1x32xf32>
    %138 = vector.shape_cast %137 : vector<1x1x32xf32> to vector<1x32xf32>
    %139 = vector.broadcast %138 : vector<1x32xf32> to vector<16x32xf32>
    %140 = arith.addf %136, %139 : vector<16x32xf32>
    %141 = arith.addf %85, %140 : vector<16x32xf32>
    %c0_60 = arith.constant 0 : index
    %c0_61 = arith.constant 0 : index
    %142 = vector.load %arg17[%c0_60, %c0_61] : memref<16x32xf32, #tpu.memory_space<vmem>>, vector<16x32xf32>
    tpu.vector_store %arg17[%c0_60, %c0_61], %141 {strides = array<i32>} : memref<16x32xf32, #tpu.memory_space<vmem>>, vector<16x32xf32>,
    %c1_i32 = arith.constant 1 : i32
    %143 = arith.cmpi eq, %arg0, %c1_i32 : i32
    %144 = arith.extui %143 : i1 to i32
    %c0_i32_62 = arith.constant 0 : i32
    %145 = arith.cmpi ne, %144, %c0_i32_62 : i32
    scf.if %145 {
      %c0_63 = arith.constant 0 : index
      %c0_64 = arith.constant 0 : index
      %146 = vector.load %arg14[%c0_63, %c0_64] : memref<1x32xf32, #tpu.memory_space<vmem>>, vector<1x32xf32>
      %c0_65 = arith.constant 0 : index
      %c0_66 = arith.constant 0 : index
      %147 = vector.load %arg15[%c0_65, %c0_66] : memref<1x32xf32, #tpu.memory_space<vmem>>, vector<1x32xf32>
      %cst_67 = arith.constant dense<0.000000e+00> : vector<16xf32>
      %148 = vector.multi_reduction <add>, %141, %cst_67 [1] : vector<16x32xf32> to vector<16xf32>
      %149 = vector.shape_cast %148 : vector<16xf32> to vector<16x1xf32>
      %cst_68 = arith.constant 3.200000e+01 : f32
      %150 = vector.broadcast %cst_68 : f32 to vector<16x1xf32>
      %151 = arith.divf %149, %150 : vector<16x1xf32>
      %152 = vector.broadcast %151 : vector<16x1xf32> to vector<16x32xf32>
      %153 = arith.subf %141, %152 : vector<16x32xf32>
      %154 = arith.mulf %153, %153 : vector<16x32xf32>
      %cst_69 = arith.constant dense<0.000000e+00> : vector<16xf32>
      %155 = vector.multi_reduction <add>, %154, %cst_69 [1] : vector<16x32xf32> to vector<16xf32>
      %156 = vector.shape_cast %155 : vector<16xf32> to vector<16x1xf32>
      %cst_70 = arith.constant 3.200000e+01 : f32
      %157 = vector.broadcast %cst_70 : f32 to vector<16x1xf32>
      %158 = arith.divf %156, %157 : vector<16x1xf32>
      %159 = vector.broadcast %151 : vector<16x1xf32> to vector<16x32xf32>
      %160 = arith.subf %141, %159 : vector<16x32xf32>
      %cst_71 = arith.constant 9.99999974E-6 : f32
      %161 = vector.broadcast %cst_71 : f32 to vector<16x1xf32>
      %162 = arith.addf %158, %161 : vector<16x1xf32>
      %163 = math.rsqrt %162 : vector<16x1xf32>
      %164 = vector.broadcast %163 : vector<16x1xf32> to vector<16x32xf32>
      %165 = arith.mulf %160, %164 : vector<16x32xf32>
      %166 = vector.broadcast %146 : vector<1x32xf32> to vector<16x32xf32>
      %167 = arith.mulf %165, %166 : vector<16x32xf32>
      %168 = vector.broadcast %147 : vector<1x32xf32> to vector<16x32xf32>
      %169 = arith.addf %167, %168 : vector<16x32xf32>
      %170 = arith.truncf %169 : vector<16x32xf32> to vector<16x32xbf16>
      %c0_72 = arith.constant 0 : index
      %c0_73 = arith.constant 0 : index
      %171 = vector.load %arg16[%c0_72, %c0_73] : memref<16x32xbf16, #tpu.memory_space<vmem>>, vector<16x32xbf16>
      tpu.vector_store %arg16[%c0_72, %c0_73], %170 {strides = array<i32>} : memref<16x32xbf16, #tpu.memory_space<vmem>>, vector<16x32xbf16>,
    } else {
    }
    return
  }
  func.func @transform_0(%arg0: i32) -> (i32, i32) {
    %c0_i32 = arith.constant 0 : i32
    %c0_i32_0 = arith.constant 0 : i32
    %c0_i32_1 = arith.constant 0 : i32
    return %c0_i32, %c0_i32_0 : i32, i32
  }
  func.func @transform_1(%arg0: i32) -> (i32, i32, i32) {
    %c0_i32 = arith.constant 0 : i32
    %c0_i32_0 = arith.constant 0 : i32
    %c0_i32_1 = arith.constant 0 : i32
    return %arg0, %c0_i32, %c0_i32_0 : i32, i32, i32
  }
  func.func @transform_2(%arg0: i32) -> (i32, i32, i32) {
    %c0_i32 = arith.constant 0 : i32
    %c0_i32_0 = arith.constant 0 : i32
    %c0_i32_1 = arith.constant 0 : i32
    return %arg0, %c0_i32, %c0_i32_0 : i32, i32, i32
  }
  func.func @transform_3(%arg0: i32) -> (i32, i32, i32) {
    %c0_i32 = arith.constant 0 : i32
    %c0_i32_0 = arith.constant 0 : i32
    %c0_i32_1 = arith.constant 0 : i32
    return %arg0, %c0_i32, %c0_i32_0 : i32, i32, i32
  }
  func.func @transform_4(%arg0: i32) -> (i32, i32, i32) {
    %c0_i32 = arith.constant 0 : i32
    %c0_i32_0 = arith.constant 0 : i32
    %c0_i32_1 = arith.constant 0 : i32
    return %arg0, %c0_i32, %c0_i32_0 : i32, i32, i32
  }
  func.func @transform_5(%arg0: i32) -> (i32, i32, i32) {
    %c0_i32 = arith.constant 0 : i32
    %c0_i32_0 = arith.constant 0 : i32
    %c0_i32_1 = arith.constant 0 : i32
    return %arg0, %c0_i32, %c0_i32_0 : i32, i32, i32
  }
  func.func @transform_6(%arg0: i32) -> (i32, i32, i32) {
    %c0_i32 = arith.constant 0 : i32
    %c0_i32_0 = arith.constant 0 : i32
    %c0_i32_1 = arith.constant 0 : i32
    return %arg0, %c0_i32, %c0_i32_0 : i32, i32, i32
  }
  func.func @transform_7(%arg0: i32) -> (i32, i32, i32) {
    %c0_i32 = arith.constant 0 : i32
    %c0_i32_0 = arith.constant 0 : i32
    %c0_i32_1 = arith.constant 0 : i32
    return %arg0, %c0_i32, %c0_i32_0 : i32, i32, i32
  }
  func.func @transform_8(%arg0: i32) -> (i32, i32, i32) {
    %c0_i32 = arith.constant 0 : i32
    %c0_i32_0 = arith.constant 0 : i32
    %c0_i32_1 = arith.constant 0 : i32
    return %arg0, %c0_i32, %c0_i32_0 : i32, i32, i32
  }
  func.func @transform_9(%arg0: i32) -> (i32, i32, i32) {
    %c0_i32 = arith.constant 0 : i32
    %c0_i32_0 = arith.constant 0 : i32
    %c0_i32_1 = arith.constant 0 : i32
    return %arg0, %c0_i32, %c0_i32_0 : i32, i32, i32
  }
  func.func @transform_10(%arg0: i32) -> (i32, i32, i32) {
    %c0_i32 = arith.constant 0 : i32
    %c0_i32_0 = arith.constant 0 : i32
    %c0_i32_1 = arith.constant 0 : i32
    return %arg0, %c0_i32, %c0_i32_0 : i32, i32, i32
  }
  func.func @transform_11(%arg0: i32) -> (i32, i32, i32) {
    %c0_i32 = arith.constant 0 : i32
    %c0_i32_0 = arith.constant 0 : i32
    %c0_i32_1 = arith.constant 0 : i32
    return %arg0, %c0_i32, %c0_i32_0 : i32, i32, i32
  }
  func.func @transform_12(%arg0: i32) -> (i32, i32, i32) {
    %c0_i32 = arith.constant 0 : i32
    %c0_i32_0 = arith.constant 0 : i32
    %c0_i32_1 = arith.constant 0 : i32
    return %arg0, %c0_i32, %c0_i32_0 : i32, i32, i32
  }
  func.func @transform_13(%arg0: i32) -> (i32, i32) {
    %c0_i32 = arith.constant 0 : i32
    %c0_i32_0 = arith.constant 0 : i32
    %c0_i32_1 = arith.constant 0 : i32
    return %c0_i32, %c0_i32_0 : i32, i32
  }
  func.func @transform_14(%arg0: i32) -> (i32, i32) {
    %c0_i32 = arith.constant 0 : i32
    %c0_i32_0 = arith.constant 0 : i32
    %c0_i32_1 = arith.constant 0 : i32
    return %c0_i32, %c0_i32_0 : i32, i32
  }
  func.func @transform_15(%arg0: i32) -> (i32, i32) {
    %c0_i32 = arith.constant 0 : i32
    %c0_i32_0 = arith.constant 0 : i32
    %c0_i32_1 = arith.constant 0 : i32
    return %c0_i32, %c0_i32_0 : i32, i32
  }
}

</mosaic_0001>

<llo_original>
// kernel: tpu_custom_call.1
$region0: #{tpu_custom_call.1}
  #allocation0 [shape = 'u32[]', space=smem, size = 0x4, offset = 0x4, fixed_abs, tag = 'smem constant byte address 0x4 - core index']
  #allocation1 [shape = 'u32[72,128]{1,0:T(1,128)}', space=vmem, size = 0x9000, scoped, tag = 'internal scratch']
  #allocation2 [shape = 'f32[16,32]{1,0:T(8,128)}', space=vmem, size = 0x2000, scoped, tag = 'scratch operand']
  %s0 = inlined_call_operand.hbm [shape: f32[16,32], index: 0, kind: input, shape index: {}]
  %s1 = inlined_call_operand.hbm [shape: f32[2,1,32], index: 1, kind: input, shape index: {}]
  %s2 = inlined_call_operand.hbm [shape: f32[2,1,32], index: 2, kind: input, shape index: {}]
  %s3 = inlined_call_operand.vmem [shape: bf16[2,32,96], index: 3, kind: input, shape index: {}]
  %s4 = inlined_call_operand.vmem [shape: f32[2,1,96], index: 4, kind: input, shape index: {}]
  %s5 = inlined_call_operand.vmem [shape: bf16[2,32,32], index: 5, kind: input, shape index: {}]
  %s6 = inlined_call_operand.vmem [shape: f32[2,1,32], index: 6, kind: input, shape index: {}]
  %s7 = inlined_call_operand.hbm [shape: f32[2,1,32], index: 7, kind: input, shape index: {}]
  %s8 = inlined_call_operand.vmem [shape: f32[2,1,32], index: 8, kind: input, shape index: {}]
  %s9 = inlined_call_operand.vmem [shape: bf16[2,32,64], index: 9, kind: input, shape index: {}]
  %s10 = inlined_call_operand.vmem [shape: f32[2,1,64], index: 10, kind: input, shape index: {}]
  %s11 = inlined_call_operand.vmem [shape: bf16[2,64,32], index: 11, kind: input, shape index: {}]
  %s12 = inlined_call_operand.vmem [shape: f32[2,1,32], index: 12, kind: input, shape index: {}]
  %s13 = inlined_call_operand.vmem [shape: f32[1,32], index: 13, kind: input, shape index: {}]
  %s14 = inlined_call_operand.vmem [shape: f32[1,32], index: 14, kind: input, shape index: {}]
  %s15 = inlined_call_operand.hbm [shape: bf16[16,32], index: 15, kind: output, shape index: {}]
  %s16 = sld [smem:[#allocation0]]
  $region117: #{tpu_custom_call.1} parent=0
    _
  %s18 = ssub.s32 1, %s16
  %s19 = scalar_select 0, %s18, %s16
  $region1: #{tpu_custom_call.1} parent=0
    #allocation3 [shape = 'u8[8192]{0}', space=vmem, size = 0x2000, scoped, tag = 'input window, operand 0, single buffered']
    #allocation4 [shape = 's32[2]{0}', space=sflag, size = 0x8, scoped, tag = 'scoped memory for tpu_custom_call.1']
    #allocation5 [shape = 's32[2]{0}', space=sflag, size = 0x8, scoped, tag = 'scoped memory for tpu_custom_call.1']
    #allocation6 [shape = 'u8[1024]{0}', space=vmem, size = 0x400, scoped, tag = 'input window, operand 1']
    #allocation7 [shape = 's32[2]{0}', space=sflag, size = 0x8, scoped, tag = 'scoped memory for tpu_custom_call.1']
    #allocation8 [shape = 'u8[1024]{0}', space=vmem, size = 0x400, scoped, tag = 'input window, operand 2']
    #allocation9 [shape = 'u8[1024]{0}', space=vmem, size = 0x400, scoped, tag = 'input window, operand 7']
    #allocation10 [shape = 's32[2]{0}', space=sflag, size = 0x8, scoped, tag = 'scoped memory for tpu_custom_call.1']
    #allocation11 [shape = 'u8[4096]{0}', space=vmem, size = 0x1000, scoped, tag = 'output window, operand 0, single buffered']
    %20 = vsyncpa [#allocation4], 0
    %21 = vsyncpa [#allocation7], 0
    %s22 = scalar_lea.sflag [#allocation7], 1
    %23 = vsyncpa %s22, 0
    %24 = vsyncpa [#allocation10], 0
    %s25 = scalar_lea.sflag [#allocation10], 1
    %26 = vsyncpa %s25, 0
    %27 = vsyncpa [#allocation5], 0
    loop: start=0, step=1, limit=4
    $region2: #{tpu_custom_call.1} parent=1 // loop_pre_header
      _
    $region3: #{tpu_custom_call.1} parent=1 // loop_header
      %s29 = sphi 0, %s33
      %p30 = scmp.ge.s32.totalorder %s29, 4
      %s37 = sphi 0, %s37
      %s39 = sphi 0, %s37
      %s40 = sphi 0, %s39
      %s54 = sphi 0, %s40
      %s60 = sphi 0, %s62
      %s63 = sphi 0, %s60
      %s64 = sphi 0, %s63
      %s80 = sphi 0, %s64
      %s86 = sphi 0, %s88
      %s89 = sphi 0, %s86
      %s90 = sphi 0, %s89
      %s106 = sphi 0, %s90
      %s112 = sphi 0, %s114
      %s115 = sphi 0, %s112
      %s116 = sphi 0, %s115
      %s132 = sphi 0, %s116
      %s138 = sphi 0, %s140
      %s141 = sphi 0, %s138
      %s142 = sphi 0, %s141
      %s158 = sphi 0, %s142
      %s164 = sphi 0, %s166
      %s167 = sphi 0, %s164
      %s168 = sphi 0, %s167
      %s184 = sphi 0, %s168
      %s190 = sphi 0, %s192
      %s193 = sphi 0, %s190
      %s194 = sphi 0, %s193
      %s210 = sphi 0, %s194
      %s216 = sphi 0, %s218
      %s219 = sphi 0, %s216
      %s220 = sphi 0, %s219
      %s236 = sphi 0, %s220
      %s242 = sphi 0, %s244
      %s245 = sphi 0, %s242
      %s246 = sphi 0, %s245
      %s262 = sphi 0, %s246
      %s268 = sphi 0, %s270
      %s271 = sphi 0, %s268
      %s272 = sphi 0, %s271
      %s288 = sphi 0, %s272
      %s294 = sphi 0, %s296
      %s297 = sphi 0, %s294
      %s298 = sphi 0, %s297
      %s314 = sphi 0, %s298
      %s320 = sphi 0, %s322
      %s323 = sphi 0, %s320
      %s324 = sphi 0, %s323
      %s340 = sphi 0, %s324
      %s346 = sphi 0, %s348
      %s349 = sphi 0, %s346
      %s350 = sphi 0, %s349
      %s366 = sphi 0, %s350
      %s370 = sphi 0, %s370
      %s372 = sphi 0, %s370
      %s373 = sphi 0, %s372
      %s387 = sphi 0, %s373
      %s391 = sphi 0, %s391
      %s393 = sphi 0, %s391
      %s394 = sphi 0, %s393
      %s408 = sphi 0, %s394
      %s412 = sphi 0, %s412
      %s414 = sphi 0, %s412
      %s415 = sphi 0, %s414
      %s429 = sphi 0, %s415
    $region4: #{tpu_custom_call.1} parent=1 // loop_header_branch
      %32 = sbr.rel (%p30) target = $region8
    $region5: #{tpu_custom_call.1} parent=1 // loop_body
      %s34 = ssub.s32 %s29, 1
      %s35 = ssub.s32 %s29, 2
      %s36 = sadd.s32 %s29, 1
      %s38 = sadd.s32 %s37, 1
      %p41 = scmp.eq.s32.totalorder %s29, 1
      %p42 = scmp.ne.s32.totalorder %s37, %s39
      %p43 = scmp.eq.s32.totalorder %s29, 0
      %p44 = por %p42, %p43
      %p45 = scmp.ne.s32.totalorder %s37, %s39
      %p46 = scmp.eq.s32.totalorder %s34, 1
      %p47 = por %p45, %p46
      %p48 = scmp.ne.s32.totalorder %s39, %s40
      %p49 = scmp.eq.s32.totalorder %s34, 0
      %p50 = por %p48, %p49
      %p51 = scmp.ne.s32.totalorder %s39, %s40
      %p52 = scmp.eq.s32.totalorder %s35, 1
      %p53 = por %p51, %p52
      %p55 = scmp.ne.s32.totalorder %s40, %s54
      %p56 = scmp.eq.s32.totalorder %s35, 0
      %p57 = por %p55, %p56
      %s58 = ssub.s32 %s29, %s36
      %p59 = scmp.eq.s32.totalorder %s58, 0
      %s61 = sadd.s32 %s60, 1
      %s62 = scalar_select %p59, %s60, %s61
      %p65 = pneg %p59
      %p66 = scmp.eq.s32.totalorder %s29, 1
      %p67 = por %p65, %p66
      %p68 = scmp.ne.s32.totalorder %s60, %s63
      %p69 = scmp.eq.s32.totalorder %s29, 0
      %p70 = por %p68, %p69
      %p71 = scmp.ne.s32.totalorder %s60, %s63
      %p72 = scmp.eq.s32.totalorder %s34, 1
      %p73 = por %p71, %p72
      %p74 = scmp.ne.s32.totalorder %s63, %s64
      %p75 = scmp.eq.s32.totalorder %s34, 0
      %p76 = por %p74, %p75
      %p77 = scmp.ne.s32.totalorder %s63, %s64
      %p78 = scmp.eq.s32.totalorder %s35, 1
      %p79 = por %p77, %p78
      %p81 = scmp.ne.s32.totalorder %s64, %s80
      %p82 = scmp.eq.s32.totalorder %s35, 0
      %p83 = por %p81, %p82
      %s84 = ssub.s32 %s29, %s36
      %p85 = scmp.eq.s32.totalorder %s84, 0
      %s87 = sadd.s32 %s86, 1
      %s88 = scalar_select %p85, %s86, %s87
      %p91 = pneg %p85
      %p92 = scmp.eq.s32.totalorder %s29, 1
      %p93 = por %p91, %p92
      %p94 = scmp.ne.s32.totalorder %s86, %s89
      %p95 = scmp.eq.s32.totalorder %s29, 0
      %p96 = por %p94, %p95
      %p97 = scmp.ne.s32.totalorder %s86, %s89
      %p98 = scmp.eq.s32.totalorder %s34, 1
      %p99 = por %p97, %p98
      %p100 = scmp.ne.s32.totalorder %s89, %s90
      %p101 = scmp.eq.s32.totalorder %s34, 0
      %p102 = por %p100, %p101
      %p103 = scmp.ne.s32.totalorder %s89, %s90
      %p104 = scmp.eq.s32.totalorder %s35, 1
      %p105 = por %p103, %p104
      %p107 = scmp.ne.s32.totalorder %s90, %s106
      %p108 = scmp.eq.s32.totalorder %s35, 0
      %p109 = por %p107, %p108
      %s110 = ssub.s32 %s29, %s36
      %p111 = scmp.eq.s32.totalorder %s110, 0
      %s113 = sadd.s32 %s112, 1
      %s114 = scalar_select %p111, %s112, %s113
      %p117 = pneg %p111
      %p118 = scmp.eq.s32.totalorder %s29, 1
      %p119 = por %p117, %p118
      %p120 = scmp.ne.s32.totalorder %s112, %s115
      %p121 = scmp.eq.s32.totalorder %s29, 0
      %p122 = por %p120, %p121
      %p123 = scmp.ne.s32.totalorder %s112, %s115
      %p124 = scmp.eq.s32.totalorder %s34, 1
      %p125 = por %p123, %p124
      %p126 = scmp.ne.s32.totalorder %s115, %s116
      %p127 = scmp.eq.s32.totalorder %s34, 0
      %p128 = por %p126, %p127
      %p129 = scmp.ne.s32.totalorder %s115, %s116
      %p130 = scmp.eq.s32.totalorder %s35, 1
      %p131 = por %p129, %p130
      %p133 = scmp.ne.s32.totalorder %s116, %s132
      %p134 = scmp.eq.s32.totalorder %s35, 0
      %p135 = por %p133, %p134
      %s136 = ssub.s32 %s29, %s36
      %p137 = scmp.eq.s32.totalorder %s136, 0
      %s139 = sadd.s32 %s138, 1
      %s140 = scalar_select %p137, %s138, %s139
      %p143 = pneg %p137
      %p144 = scmp.eq.s32.totalorder %s29, 1
      %p145 = por %p143, %p144
      %p146 = scmp.ne.s32.totalorder %s138, %s141
      %p147 = scmp.eq.s32.totalorder %s29, 0
      %p148 = por %p146, %p147
      %p149 = scmp.ne.s32.totalorder %s138, %s141
      %p150 = scmp.eq.s32.totalorder %s34, 1
      %p151 = por %p149, %p150
      %p152 = scmp.ne.s32.totalorder %s141, %s142
      %p153 = scmp.eq.s32.totalorder %s34, 0
      %p154 = por %p152, %p153
      %p155 = scmp.ne.s32.totalorder %s141, %s142
      %p156 = scmp.eq.s32.totalorder %s35, 1
      %p157 = por %p155, %p156
      %p159 = scmp.ne.s32.totalorder %s142, %s158
      %p160 = scmp.eq.s32.totalorder %s35, 0
      %p161 = por %p159, %p160
      %s162 = ssub.s32 %s29, %s36
      %p163 = scmp.eq.s32.totalorder %s162, 0
      %s165 = sadd.s32 %s164, 1
      %s166 = scalar_select %p163, %s164, %s165
      %p169 = pneg %p163
      %p170 = scmp.eq.s32.totalorder %s29, 1
      %p171 = por %p169, %p170
      %p172 = scmp.ne.s32.totalorder %s164, %s167
      %p173 = scmp.eq.s32.totalorder %s29, 0
      %p174 = por %p172, %p173
      %p175 = scmp.ne.s32.totalorder %s164, %s167
      %p176 = scmp.eq.s32.totalorder %s34, 1
      %p177 = por %p175, %p176
      %p178 = scmp.ne.s32.totalorder %s167, %s168
      %p179 = scmp.eq.s32.totalorder %s34, 0
      %p180 = por %p178, %p179
      %p181 = scmp.ne.s32.totalorder %s167, %s168
      %p182 = scmp.eq.s32.totalorder %s35, 1
      %p183 = por %p181, %p182
      %p185 = scmp.ne.s32.totalorder %s168, %s184
      %p186 = scmp.eq.s32.totalorder %s35, 0
      %p187 = por %p185, %p186
      %s188 = ssub.s32 %s29, %s36
      %p189 = scmp.eq.s32.totalorder %s188, 0
      %s191 = sadd.s32 %s190, 1
      %s192 = scalar_select %p189, %s190, %s191
      %p195 = pneg %p189
      %p196 = scmp.eq.s32.totalorder %s29, 1
      %p197 = por %p195, %p196
      %p198 = scmp.ne.s32.totalorder %s190, %s193
      %p199 = scmp.eq.s32.totalorder %s29, 0
      %p200 = por %p198, %p199
      %p201 = scmp.ne.s32.totalorder %s190, %s193
      %p202 = scmp.eq.s32.totalorder %s34, 1
      %p203 = por %p201, %p202
      %p204 = scmp.ne.s32.totalorder %s193, %s194
      %p205 = scmp.eq.s32.totalorder %s34, 0
      %p206 = por %p204, %p205
      %p207 = scmp.ne.s32.totalorder %s193, %s194
      %p208 = scmp.eq.s32.totalorder %s35, 1
      %p209 = por %p207, %p208
      %p211 = scmp.ne.s32.totalorder %s194, %s210
      %p212 = scmp.eq.s32.totalorder %s35, 0
      %p213 = por %p211, %p212
      %s214 = ssub.s32 %s29, %s36
      %p215 = scmp.eq.s32.totalorder %s214, 0
      %s217 = sadd.s32 %s216, 1
      %s218 = scalar_select %p215, %s216, %s217
      %p221 = pneg %p215
      %p222 = scmp.eq.s32.totalorder %s29, 1
      %p223 = por %p221, %p222
      %p224 = scmp.ne.s32.totalorder %s216, %s219
      %p225 = scmp.eq.s32.totalorder %s29, 0
      %p226 = por %p224, %p225
      %p227 = scmp.ne.s32.totalorder %s216, %s219
      %p228 = scmp.eq.s32.totalorder %s34, 1
      %p229 = por %p227, %p228
      %p230 = scmp.ne.s32.totalorder %s219, %s220
      %p231 = scmp.eq.s32.totalorder %s34, 0
      %p232 = por %p230, %p231
      %p233 = scmp.ne.s32.totalorder %s219, %s220
      %p234 = scmp.eq.s32.totalorder %s35, 1
      %p235 = por %p233, %p234
      %p237 = scmp.ne.s32.totalorder %s220, %s236
      %p238 = scmp.eq.s32.totalorder %s35, 0
      %p239 = por %p237, %p238
      %s240 = ssub.s32 %s29, %s36
      %p241 = scmp.eq.s32.totalorder %s240, 0
      %s243 = sadd.s32 %s242, 1
      %s244 = scalar_select %p241, %s242, %s243
      %p247 = pneg %p241
      %p248 = scmp.eq.s32.totalorder %s29, 1
      %p249 = por %p247, %p248
      %p250 = scmp.ne.s32.totalorder %s242, %s245
      %p251 = scmp.eq.s32.totalorder %s29, 0
      %p252 = por %p250, %p251
      %p253 = scmp.ne.s32.totalorder %s242, %s245
      %p254 = scmp.eq.s32.totalorder %s34, 1
      %p255 = por %p253, %p254
      %p256 = scmp.ne.s32.totalorder %s245, %s246
      %p257 = scmp.eq.s32.totalorder %s34, 0
      %p258 = por %p256, %p257
      %p259 = scmp.ne.s32.totalorder %s245, %s246
      %p260 = scmp.eq.s32.totalorder %s35, 1
      %p261 = por %p259, %p260
      %p263 = scmp.ne.s32.totalorder %s246, %s262
      %p264 = scmp.eq.s32.totalorder %s35, 0
      %p265 = por %p263, %p264
      %s266 = ssub.s32 %s29, %s36
      %p267 = scmp.eq.s32.totalorder %s266, 0
      %s269 = sadd.s32 %s268, 1
      %s270 = scalar_select %p267, %s268, %s269
      %p273 = pneg %p267
      %p274 = scmp.eq.s32.totalorder %s29, 1
      %p275 = por %p273, %p274
      %p276 = scmp.ne.s32.totalorder %s268, %s271
      %p277 = scmp.eq.s32.totalorder %s29, 0
      %p278 = por %p276, %p277
      %p279 = scmp.ne.s32.totalorder %s268, %s271
      %p280 = scmp.eq.s32.totalorder %s34, 1
      %p281 = por %p279, %p280
      %p282 = scmp.ne.s32.totalorder %s271, %s272
      %p283 = scmp.eq.s32.totalorder %s34, 0
      %p284 = por %p282, %p283
      %p285 = scmp.ne.s32.totalorder %s271, %s272
      %p286 = scmp.eq.s32.totalorder %s35, 1
      %p287 = por %p285, %p286
      %p289 = scmp.ne.s32.totalorder %s272, %s288
      %p290 = scmp.eq.s32.totalorder %s35, 0
      %p291 = por %p289, %p290
      %s292 = ssub.s32 %s29, %s36
      %p293 = scmp.eq.s32.totalorder %s292, 0
      %s295 = sadd.s32 %s294, 1
      %s296 = scalar_select %p293, %s294, %s295
      %p299 = pneg %p293
      %p300 = scmp.eq.s32.totalorder %s29, 1
      %p301 = por %p299, %p300
      %p302 = scmp.ne.s32.totalorder %s294, %s297
      %p303 = scmp.eq.s32.totalorder %s29, 0
      %p304 = por %p302, %p303
      %p305 = scmp.ne.s32.totalorder %s294, %s297
      %p306 = scmp.eq.s32.totalorder %s34, 1
      %p307 = por %p305, %p306
      %p308 = scmp.ne.s32.totalorder %s297, %s298
      %p309 = scmp.eq.s32.totalorder %s34, 0
      %p310 = por %p308, %p309
      %p311 = scmp.ne.s32.totalorder %s297, %s298
      %p312 = scmp.eq.s32.totalorder %s35, 1
      %p313 = por %p311, %p312
      %p315 = scmp.ne.s32.totalorder %s298, %s314
      %p316 = scmp.eq.s32.totalorder %s35, 0
      %p317 = por %p315, %p316
      %s318 = ssub.s32 %s29, %s36
      %p319 = scmp.eq.s32.totalorder %s318, 0
      %s321 = sadd.s32 %s320, 1
      %s322 = scalar_select %p319, %s320, %s321
      %p325 = pneg %p319
      %p326 = scmp.eq.s32.totalorder %s29, 1
      %p327 = por %p325, %p326
      %p328 = scmp.ne.s32.totalorder %s320, %s323
      %p329 = scmp.eq.s32.totalorder %s29, 0
      %p330 = por %p328, %p329
      %p331 = scmp.ne.s32.totalorder %s320, %s323
      %p332 = scmp.eq.s32.totalorder %s34, 1
      %p333 = por %p331, %p332
      %p334 = scmp.ne.s32.totalorder %s323, %s324
      %p335 = scmp.eq.s32.totalorder %s34, 0
      %p336 = por %p334, %p335
      %p337 = scmp.ne.s32.totalorder %s323, %s324
      %p338 = scmp.eq.s32.totalorder %s35, 1
      %p339 = por %p337, %p338
      %p341 = scmp.ne.s32.totalorder %s324, %s340
      %p342 = scmp.eq.s32.totalorder %s35, 0
      %p343 = por %p341, %p342
      %s344 = ssub.s32 %s29, %s36
      %p345 = scmp.eq.s32.totalorder %s344, 0
      %s347 = sadd.s32 %s346, 1
      %s348 = scalar_select %p345, %s346, %s347
      %p351 = pneg %p345
      %p352 = scmp.eq.s32.totalorder %s29, 1
      %p353 = por %p351, %p352
      %p354 = scmp.ne.s32.totalorder %s346, %s349
      %p355 = scmp.eq.s32.totalorder %s29, 0
      %p356 = por %p354, %p355
      %p357 = scmp.ne.s32.totalorder %s346, %s349
      %p358 = scmp.eq.s32.totalorder %s34, 1
      %p359 = por %p357, %p358
      %p360 = scmp.ne.s32.totalorder %s349, %s350
      %p361 = scmp.eq.s32.totalorder %s34, 0
      %p362 = por %p360, %p361
      %p363 = scmp.ne.s32.totalorder %s349, %s350
      %p364 = scmp.eq.s32.totalorder %s35, 1
      %p365 = por %p363, %p364
      %p367 = scmp.ne.s32.totalorder %s350, %s366
      %p368 = scmp.eq.s32.totalorder %s35, 0
      %p369 = por %p367, %p368
      %s371 = sadd.s32 %s370, 1
      %p374 = scmp.eq.s32.totalorder %s29, 1
      %p375 = scmp.ne.s32.totalorder %s370, %s372
      %p376 = scmp.eq.s32.totalorder %s29, 0
      %p377 = por %p375, %p376
      %p378 = scmp.ne.s32.totalorder %s370, %s372
      %p379 = scmp.eq.s32.totalorder %s34, 1
      %p380 = por %p378, %p379
      %p381 = scmp.ne.s32.totalorder %s372, %s373
      %p382 = scmp.eq.s32.totalorder %s34, 0
      %p383 = por %p381, %p382
      %p384 = scmp.ne.s32.totalorder %s372, %s373
      %p385 = scmp.eq.s32.totalorder %s35, 1
      %p386 = por %p384, %p385
      %p388 = scmp.ne.s32.totalorder %s373, %s387
      %p389 = scmp.eq.s32.totalorder %s35, 0
      %p390 = por %p388, %p389
      %s392 = sadd.s32 %s391, 1
      %p395 = scmp.eq.s32.totalorder %s29, 1
      %p396 = scmp.ne.s32.totalorder %s391, %s393
      %p397 = scmp.eq.s32.totalorder %s29, 0
      %p398 = por %p396, %p397
      %p399 = scmp.ne.s32.totalorder %s391, %s393
      %p400 = scmp.eq.s32.totalorder %s34, 1
      %p401 = por %p399, %p400
      %p402 = scmp.ne.s32.totalorder %s393, %s394
      %p403 = scmp.eq.s32.totalorder %s34, 0
      %p404 = por %p402, %p403
      %p405 = scmp.ne.s32.totalorder %s393, %s394
      %p406 = scmp.eq.s32.totalorder %s35, 1
      %p407 = por %p405, %p406
      %p409 = scmp.ne.s32.totalorder %s394, %s408
      %p410 = scmp.eq.s32.totalorder %s35, 0
      %p411 = por %p409, %p410
      %s413 = sadd.s32 %s412, 1
      %p416 = scmp.eq.s32.totalorder %s29, 1
      %p417 = scmp.ne.s32.totalorder %s412, %s414
      %p418 = scmp.eq.s32.totalorder %s29, 0
      %p419 = por %p417, %p418
      %p420 = scmp.ne.s32.totalorder %s412, %s414
      %p421 = scmp.eq.s32.totalorder %s34, 1
      %p422 = por %p420, %p421
      %p423 = scmp.ne.s32.totalorder %s414, %s415
      %p424 = scmp.eq.s32.totalorder %s34, 0
      %p425 = por %p423, %p424
      %p426 = scmp.ne.s32.totalorder %s414, %s415
      %p427 = scmp.eq.s32.totalorder %s35, 1
      %p428 = por %p426, %p427
      %p430 = scmp.ne.s32.totalorder %s415, %s429
      %p431 = scmp.eq.s32.totalorder %s35, 0
      %p432 = por %p430, %p431
      %p433 = scmp.le.s32.totalorder 1, %s29
      %p434 = scmp.lt.s32.totalorder %s29, 3
      %p435 = pnand %p433, %p434
      %p436 = pneg %p435
      // Predicated region
      $region9: #{tpu_custom_call.1} parent=5 // pred_check
        _
      $region10: #{tpu_custom_call.1} parent=5 // pred_check_branch
        %438 = sbr.rel (%p435) target = $region12
      $region11: #{tpu_custom_call.1} parent=5 // pred_region
        %s439 = ssub.s32 %s29, 1
        // Predicated region
        $region13: #{tpu_custom_call.1} parent=11 // pred_check
          %p440 = pneg %p50
        $region14: #{tpu_custom_call.1} parent=11 // pred_check_branch
          %442 = sbr.rel (%p440) target = $region16
        $region15: #{tpu_custom_call.1} parent=11 // pred_region
          %444 = vsyncadd [#allocation4], 0
          %s445 = sshll.u32 %s0, 4
          %s446 = int_to_ptr.hbm [resolvable:$true] %s445
          %s447 = sshll.u32 [#allocation3], 4
          %s448 = int_to_ptr.vmem [resolvable:$true] %s447
          %453 = dma.hbm_to_vmem [thread:$0]  %s446, 256, %s448, [#allocation4], 128, 128, 8
        $region16: #{tpu_custom_call.1} parent=11 // pred_fallthru
          _
        // Predicated region
        $region17: #{tpu_custom_call.1} parent=11 // pred_check
          %p454 = pneg %p383
        $region18: #{tpu_custom_call.1} parent=11 // pred_check_branch
          %456 = sbr.rel (%p454) target = $region20
        $region19: #{tpu_custom_call.1} parent=11 // pred_region
          _
        $region20: #{tpu_custom_call.1} parent=11 // pred_fallthru
          _
        // Predicated region
        $region21: #{tpu_custom_call.1} parent=11 // pred_check
          %p457 = pneg %p404
        $region22: #{tpu_custom_call.1} parent=11 // pred_check_branch
          %459 = sbr.rel (%p457) target = $region24
        $region23: #{tpu_custom_call.1} parent=11 // pred_region
          _
        $region24: #{tpu_custom_call.1} parent=11 // pred_fallthru
          _
      $region12: #{tpu_custom_call.1} parent=5 // pred_fallthru
        _
      %p460 = scmp.lt.s32.totalorder %s29, 2
      // Predicated region
      $region25: #{tpu_custom_call.1} parent=5 // pred_check
        %p461 = pneg %p460
      $region26: #{tpu_custom_call.1} parent=5 // pred_check_branch
        %463 = sbr.rel (%p461) target = $region28
      $region27: #{tpu_custom_call.1} parent=5 // pred_region
        // Predicated region
        $region29: #{tpu_custom_call.1} parent=27 // pred_check
          %p464 = pneg %p70
        $region30: #{tpu_custom_call.1} parent=27 // pred_check_branch
          %466 = sbr.rel (%p464) target = $region32
        $region31: #{tpu_custom_call.1} parent=27 // pred_region
          %s467 = sand.u32 %s29, 1
          %s468 = scalar_lea.sflag [#allocation7], %s467
          %s469 = sand.u32 %s60, 1
          %s470 = scalar_lea.vmem [#allocation6], %s469
          %472 = vsyncadd %s468, 0
          %s473 = scalar_lea.hbm %s1, %s29
          %s475 = sshll.u32 %s473, 4
          %s476 = int_to_ptr.hbm [resolvable:$true] %s475
          %s477 = sshll.u32 %s470, 4
          %s478 = int_to_ptr.vmem [resolvable:$true] %s477
          %480 = dma.hbm_to_vmem [thread:$0]  %s476, 16, %s478, %s468
        $region32: #{tpu_custom_call.1} parent=27 // pred_fallthru
          _
        // Predicated region
        $region33: #{tpu_custom_call.1} parent=27 // pred_check
          %p481 = pneg %p96
        $region34: #{tpu_custom_call.1} parent=27 // pred_check_branch
          %483 = sbr.rel (%p481) target = $region36
        $region35: #{tpu_custom_call.1} parent=27 // pred_region
          %s484 = sand.u32 %s29, 1
          %s485 = scalar_lea.sflag [#allocation7], %s484
          %s486 = sand.u32 %s86, 1
          %s487 = scalar_lea.vmem [#allocation8], %s486
          %489 = vsyncadd %s485, 0
          %s490 = scalar_lea.hbm %s2, %s29
          %s492 = sshll.u32 %s490, 4
          %s493 = int_to_ptr.hbm [resolvable:$true] %s492
          %s494 = sshll.u32 %s487, 4
          %s495 = int_to_ptr.vmem [resolvable:$true] %s494
          %497 = dma.hbm_to_vmem [thread:$0]  %s493, 16, %s495, %s485
        $region36: #{tpu_custom_call.1} parent=27 // pred_fallthru
          _
        // Predicated region
        $region37: #{tpu_custom_call.1} parent=27 // pred_check
          %p498 = pneg %p122
        $region38: #{tpu_custom_call.1} parent=27 // pred_check_branch
          %500 = sbr.rel (%p498) target = $region40
        $region39: #{tpu_custom_call.1} parent=27 // pred_region
          %p501 = scmp.lt.s32.totalorder %s29, 1
          %s502 = scalar_select %p501, %s29, 1
          %s503 = smul.addr %s502, 4
          %s504 = smul.addr %s503, 4
          %s505 = scalar_lea.vmem %s3, %s504
        $region40: #{tpu_custom_call.1} parent=27 // pred_fallthru
          _
        // Predicated region
        $region41: #{tpu_custom_call.1} parent=27 // pred_check
          %p506 = pneg %p148
        $region42: #{tpu_custom_call.1} parent=27 // pred_check_branch
          %508 = sbr.rel (%p506) target = $region44
        $region43: #{tpu_custom_call.1} parent=27 // pred_region
          %p509 = scmp.lt.s32.totalorder %s29, 1
          %s510 = scalar_select %p509, %s29, 1
          %s511 = scalar_lea.vmem %s4, %s510
        $region44: #{tpu_custom_call.1} parent=27 // pred_fallthru
          _
        // Predicated region
        $region45: #{tpu_custom_call.1} parent=27 // pred_check
          %p512 = pneg %p174
        $region46: #{tpu_custom_call.1} parent=27 // pred_check_branch
          %514 = sbr.rel (%p512) target = $region48
        $region47: #{tpu_custom_call.1} parent=27 // pred_region
          %p515 = scmp.lt.s32.totalorder %s29, 1
          %s516 = scalar_select %p515, %s29, 1
          %s517 = smul.addr %s516, 4
          %s518 = smul.addr %s517, 4
          %s519 = scalar_lea.vmem %s5, %s518
        $region48: #{tpu_custom_call.1} parent=27 // pred_fallthru
          _
        // Predicated region
        $region49: #{tpu_custom_call.1} parent=27 // pred_check
          %p520 = pneg %p200
        $region50: #{tpu_custom_call.1} parent=27 // pred_check_branch
          %522 = sbr.rel (%p520) target = $region52
        $region51: #{tpu_custom_call.1} parent=27 // pred_region
          %p523 = scmp.lt.s32.totalorder %s29, 1
          %s524 = scalar_select %p523, %s29, 1
          %s525 = scalar_lea.vmem %s6, %s524
        $region52: #{tpu_custom_call.1} parent=27 // pred_fallthru
          _
        // Predicated region
        $region53: #{tpu_custom_call.1} parent=27 // pred_check
          %p526 = pneg %p226
        $region54: #{tpu_custom_call.1} parent=27 // pred_check_branch
          %528 = sbr.rel (%p526) target = $region56
        $region55: #{tpu_custom_call.1} parent=27 // pred_region
          %s529 = sand.u32 %s216, 1
          %s530 = scalar_lea.sflag [#allocation10], %s529
          %s531 = sand.u32 %s216, 1
          %s532 = scalar_lea.vmem [#allocation9], %s531
          %534 = vsyncadd %s530, 0
          %s535 = scalar_lea.hbm %s7, %s29
          %s537 = sshll.u32 %s535, 4
          %s538 = int_to_ptr.hbm [resolvable:$true] %s537
          %s539 = sshll.u32 %s532, 4
          %s540 = int_to_ptr.vmem [resolvable:$true] %s539
          %542 = dma.hbm_to_vmem [thread:$0]  %s538, 16, %s540, %s530
        $region56: #{tpu_custom_call.1} parent=27 // pred_fallthru
          _
        // Predicated region
        $region57: #{tpu_custom_call.1} parent=27 // pred_check
          %p543 = pneg %p252
        $region58: #{tpu_custom_call.1} parent=27 // pred_check_branch
          %545 = sbr.rel (%p543) target = $region60
        $region59: #{tpu_custom_call.1} parent=27 // pred_region
          %p546 = scmp.lt.s32.totalorder %s29, 1
          %s547 = scalar_select %p546, %s29, 1
          %s548 = scalar_lea.vmem %s8, %s547
        $region60: #{tpu_custom_call.1} parent=27 // pred_fallthru
          _
        // Predicated region
        $region61: #{tpu_custom_call.1} parent=27 // pred_check
          %p549 = pneg %p278
        $region62: #{tpu_custom_call.1} parent=27 // pred_check_branch
          %551 = sbr.rel (%p549) target = $region64
        $region63: #{tpu_custom_call.1} parent=27 // pred_region
          %p552 = scmp.lt.s32.totalorder %s29, 1
          %s553 = scalar_select %p552, %s29, 1
          %s554 = smul.addr %s553, 4
          %s555 = smul.addr %s554, 4
          %s556 = scalar_lea.vmem %s9, %s555
        $region64: #{tpu_custom_call.1} parent=27 // pred_fallthru
          _
        // Predicated region
        $region65: #{tpu_custom_call.1} parent=27 // pred_check
          %p557 = pneg %p304
        $region66: #{tpu_custom_call.1} parent=27 // pred_check_branch
          %559 = sbr.rel (%p557) target = $region68
        $region67: #{tpu_custom_call.1} parent=27 // pred_region
          %p560 = scmp.lt.s32.totalorder %s29, 1
          %s561 = scalar_select %p560, %s29, 1
          %s562 = scalar_lea.vmem %s10, %s561
        $region68: #{tpu_custom_call.1} parent=27 // pred_fallthru
          _
        // Predicated region
        $region69: #{tpu_custom_call.1} parent=27 // pred_check
          %p563 = pneg %p330
        $region70: #{tpu_custom_call.1} parent=27 // pred_check_branch
          %565 = sbr.rel (%p563) target = $region72
        $region71: #{tpu_custom_call.1} parent=27 // pred_region
          %p566 = scmp.lt.s32.totalorder %s29, 1
          %s567 = scalar_select %p566, %s29, 1
          %s568 = smul.addr %s567, 8
          %s569 = smul.addr %s568, 4
          %s570 = scalar_lea.vmem %s11, %s569
        $region72: #{tpu_custom_call.1} parent=27 // pred_fallthru
          _
        // Predicated region
        $region73: #{tpu_custom_call.1} parent=27 // pred_check
          %p571 = pneg %p356
        $region74: #{tpu_custom_call.1} parent=27 // pred_check_branch
          %573 = sbr.rel (%p571) target = $region76
        $region75: #{tpu_custom_call.1} parent=27 // pred_region
          %p574 = scmp.lt.s32.totalorder %s29, 1
          %s575 = scalar_select %p574, %s29, 1
          %s576 = scalar_lea.vmem %s12, %s575
        $region76: #{tpu_custom_call.1} parent=27 // pred_fallthru
          _
      $region28: #{tpu_custom_call.1} parent=5 // pred_fallthru
        _
      %p577 = scmp.le.s32.totalorder 1, %s29
      %p578 = scmp.lt.s32.totalorder %s29, 3
      %p579 = pnand %p577, %p578
      %p580 = pneg %p579
      // Predicated region
      $region77: #{tpu_custom_call.1} parent=5 // pred_check
        _
      $region78: #{tpu_custom_call.1} parent=5 // pred_check_branch
        %582 = sbr.rel (%p579) target = $region80
      $region79: #{tpu_custom_call.1} parent=5 // pred_region
        %s583 = ssub.s32 %s29, 1
        // Predicated region
        $region81: #{tpu_custom_call.1} parent=79 // pred_check
          %p584 = pneg %p50
        $region82: #{tpu_custom_call.1} parent=79 // pred_check_branch
          %586 = sbr.rel (%p584) target = $region84
        $region83: #{tpu_custom_call.1} parent=79 // pred_region
          %588 = dma.done [#allocation4], 256
        $region84: #{tpu_custom_call.1} parent=79 // pred_fallthru
          _
        %s589 = sand.u32 %s34, 1
        %s590 = scalar_lea.sflag [#allocation7], %s589
        %s591 = sand.u32 %s63, 1
        %s592 = scalar_lea.vmem [#allocation6], %s591
        // Predicated region
        $region85: #{tpu_custom_call.1} parent=79 // pred_check
          %p593 = pneg %p76
        $region86: #{tpu_custom_call.1} parent=79 // pred_check_branch
          %595 = sbr.rel (%p593) target = $region88
        $region87: #{tpu_custom_call.1} parent=79 // pred_region
          %597 = dma.done %s590, 16
        $region88: #{tpu_custom_call.1} parent=79 // pred_fallthru
          _
        %s598 = sand.u32 %s34, 1
        %s599 = scalar_lea.sflag [#allocation7], %s598
        %s600 = sand.u32 %s89, 1
        %s601 = scalar_lea.vmem [#allocation8], %s600
        // Predicated region
        $region89: #{tpu_custom_call.1} parent=79 // pred_check
          %p602 = pneg %p102
        $region90: #{tpu_custom_call.1} parent=79 // pred_check_branch
          %604 = sbr.rel (%p602) target = $region92
        $region91: #{tpu_custom_call.1} parent=79 // pred_region
          %606 = dma.done %s599, 16
        $region92: #{tpu_custom_call.1} parent=79 // pred_fallthru
          _
        %s607 = sand.u32 %s219, 1
        %s608 = scalar_lea.sflag [#allocation10], %s607
        %s609 = sand.u32 %s219, 1
        %s610 = scalar_lea.vmem [#allocation9], %s609
        // Predicated region
        $region93: #{tpu_custom_call.1} parent=79 // pred_check
          %p611 = pneg %p232
        $region94: #{tpu_custom_call.1} parent=79 // pred_check_branch
          %613 = sbr.rel (%p611) target = $region96
        $region95: #{tpu_custom_call.1} parent=79 // pred_region
          %615 = dma.done %s608, 16
        $region96: #{tpu_custom_call.1} parent=79 // pred_fallthru
          _
        %p616 = pneg %p50
        %p617 = pneg %p47
        %s618 = sand.u32 %s34, 1
        %s619 = scalar_lea.sflag [#allocation7], %s618
        %s620 = sand.u32 %s63, 1
        %s621 = scalar_lea.vmem [#allocation6], %s620
        %p622 = pneg %p76
        %p623 = pneg %p73
        %s624 = sand.u32 %s34, 1
        %s625 = scalar_lea.sflag [#allocation7], %s624
        %s626 = sand.u32 %s89, 1
        %s627 = scalar_lea.vmem [#allocation8], %s626
        %p628 = pneg %p102
        %p629 = pneg %p99
        %p630 = scmp.lt.s32.totalorder %s34, 1
        %s631 = scalar_select %p630, %s34, 1
        %s632 = smul.addr %s631, 4
        %s633 = smul.addr %s632, 4
        %s634 = scalar_lea.vmem %s3, %s633
        %p635 = pneg %p128
        %p636 = pneg %p125
        %p637 = scmp.lt.s32.totalorder %s34, 1
        %s638 = scalar_select %p637, %s34, 1
        %s639 = scalar_lea.vmem %s4, %s638
        %p640 = pneg %p154
        %p641 = pneg %p151
        %p642 = scmp.lt.s32.totalorder %s34, 1
        %s643 = scalar_select %p642, %s34, 1
        %s644 = smul.addr %s643, 4
        %s645 = smul.addr %s644, 4
        %s646 = scalar_lea.vmem %s5, %s645
        %p647 = pneg %p180
        %p648 = pneg %p177
        %p649 = scmp.lt.s32.totalorder %s34, 1
        %s650 = scalar_select %p649, %s34, 1
        %s651 = scalar_lea.vmem %s6, %s650
        %p652 = pneg %p206
        %p653 = pneg %p203
        %s654 = sand.u32 %s219, 1
        %s655 = scalar_lea.sflag [#allocation10], %s654
        %s656 = sand.u32 %s219, 1
        %s657 = scalar_lea.vmem [#allocation9], %s656
        %p658 = pneg %p232
        %p659 = pneg %p229
        %p660 = scmp.lt.s32.totalorder %s34, 1
        %s661 = scalar_select %p660, %s34, 1
        %s662 = scalar_lea.vmem %s8, %s661
        %p663 = pneg %p258
        %p664 = pneg %p255
        %p665 = scmp.lt.s32.totalorder %s34, 1
        %s666 = scalar_select %p665, %s34, 1
        %s667 = smul.addr %s666, 4
        %s668 = smul.addr %s667, 4
        %s669 = scalar_lea.vmem %s9, %s668
        %p670 = pneg %p284
        %p671 = pneg %p281
        %p672 = scmp.lt.s32.totalorder %s34, 1
        %s673 = scalar_select %p672, %s34, 1
        %s674 = scalar_lea.vmem %s10, %s673
        %p675 = pneg %p310
        %p676 = pneg %p307
        %p677 = scmp.lt.s32.totalorder %s34, 1
        %s678 = scalar_select %p677, %s34, 1
        %s679 = smul.addr %s678, 8
        %s680 = smul.addr %s679, 4
        %s681 = scalar_lea.vmem %s11, %s680
        %p682 = pneg %p336
        %p683 = pneg %p333
        %p684 = scmp.lt.s32.totalorder %s34, 1
        %s685 = scalar_select %p684, %s34, 1
        %s686 = scalar_lea.vmem %s12, %s685
        %p687 = pneg %p362
        %p688 = pneg %p359
        %p689 = pneg %p383
        %p690 = pneg %p380
        %p691 = pneg %p404
        %p692 = pneg %p401
        %p693 = pneg %p425
        %p694 = pneg %p422
        %p695 = scmp.lt.s32.totalorder %s34, 1
        %s696 = scalar_select %p695, %s34, 1
        %s697 = smul.addr %s696, 4
        %s698 = smul.addr %s697, 4
        %s699 = scalar_lea.vmem %s3, %s698
        %p700 = scmp.lt.s32.totalorder %s34, 1
        %s701 = scalar_select %p700, %s34, 1
        %s702 = scalar_lea.vmem %s4, %s701
        %p703 = scmp.lt.s32.totalorder %s34, 1
        %s704 = scalar_select %p703, %s34, 1
        %s705 = smul.addr %s704, 4
        %s706 = smul.addr %s705, 4
        %s707 = scalar_lea.vmem %s5, %s706
        %p708 = scmp.lt.s32.totalorder %s34, 1
        %s709 = scalar_select %p708, %s34, 1
        %s710 = scalar_lea.vmem %s6, %s709
        %p711 = scmp.lt.s32.totalorder %s34, 1
        %s712 = scalar_select %p711, %s34, 1
        %s713 = scalar_lea.vmem %s8, %s712
        %p714 = scmp.lt.s32.totalorder %s34, 1
        %s715 = scalar_select %p714, %s34, 1
        %s716 = smul.addr %s715, 4
        %s717 = smul.addr %s716, 4
        %s718 = scalar_lea.vmem %s9, %s717
        %p719 = scmp.lt.s32.totalorder %s34, 1
        %s720 = scalar_select %p719, %s34, 1
        %s721 = scalar_lea.vmem %s10, %s720
        %p722 = scmp.lt.s32.totalorder %s34, 1
        %s723 = scalar_select %p722, %s34, 1
        %s724 = smul.addr %s723, 8
        %s725 = smul.addr %s724, 4
        %s726 = scalar_lea.vmem %s11, %s725
        %p727 = scmp.lt.s32.totalorder %s34, 1
        %s728 = scalar_select %p727, %s34, 1
        %s729 = scalar_lea.vmem %s12, %s728
        %p731 = scmp.eq.s32.totalorder %s34, 0
        // Predicated region
        $region97: #{tpu_custom_call.1} parent=79 // pred_check
          %p732 = pneg %p731
        $region98: #{tpu_custom_call.1} parent=79 // pred_check_branch
          %734 = sbr.rel (%p732) target = $region100
        $region99: #{tpu_custom_call.1} parent=79 // pred_region
          %v735 = vld [vmem:[#allocation3] sm:$0xff]
          %v736 = vld [vmem:[#allocation3 + $0x8] sm:$0xff]
          %vm737 = vcmask 261120
          %738 = vst.msk [vmem:[#allocation2] sm:$0xff] %vm737, %v735
          %739 = vst.msk [vmem:[#allocation2 + $0x8] sm:$0xff] %vm737, %v736
        $region100: #{tpu_custom_call.1} parent=79 // pred_fallthru
          _
        %v740 = vld [vmem:[#allocation2] sm:$0xff]
        %v741 = vld [vmem:[#allocation2 + $0x8] sm:$0xff]
        %v742 = vld [vmem:[%s592] sm:$0x1]
        %v743 = vld [vmem:[%s601] sm:$0x1]
        %vm744 = vcmask 261120
        %v745 = vsel %vm744, %v740, 0.0
        %746 = vadd.xlane.f32.xlu0 %v745
        %v747 = vpop.xlane.xlu0 %746
        %v748 = vsel %vm744, %v741, 0.0
        %749 = vadd.xlane.f32.xlu0 %v748
        %v750 = vpop.xlane.xlu0 %749
        %v751 = vrcp.pop 32.0
        %v752 = vmul.f32 32.0, %v751
        %v753 = vsub.f32 1.0, %v752
        %v754 = vmul.f32 %v751, %v753
        %v755 = vadd.f32 %v751, %v754
        %vm756 = vweird.f32 %v751
        %v757 = vsel %vm756, %v751, %v755
        %v758 = vmul.f32 %v747, %v757
        %v759 = vmul.f32 %v750, %v757
        %v760 = vsub.f32 %v740, %v758
        %v761 = vsub.f32 %v741, %v759
        %v762 = vmul.f32 %v760, %v760
        %v763 = vmul.f32 %v761, %v761
        %v764 = vsel %vm744, %v762, 0.0
        %765 = vadd.xlane.f32.xlu0 %v764
        %v766 = vpop.xlane.xlu0 %765
        %v767 = vsel %vm744, %v763, 0.0
        %768 = vadd.xlane.f32.xlu0 %v767
        %v769 = vpop.xlane.xlu0 %768
        %v770 = vmul.f32 %v766, %v757
        %v771 = vmul.f32 %v769, %v757
        %v772 = vadd.f32 %v770, 1e-05
        %v773 = vadd.f32 %v771, 1e-05
        %v774 = vrsqrt.pop %v772
        %v775 = vmul.f32 %v774, %v772
        %v776 = vmul.f32 %v775, %v774
        %v777 = vmul.f32 0.5, %v776
        %v778 = vsub.f32 1.5, %v777
        %v779 = vmul.f32 %v774, %v778
        %vm780 = vweird.f32 %v772
        %vm781 = vweird.f32 %v774
        %vm782 = vmor %vm780, %vm781
        %v783 = vsel %vm782, %v774, %v779
        %v784 = vrsqrt.pop %v773
        %v785 = vmul.f32 %v784, %v773
        %v786 = vmul.f32 %v785, %v784
        %v787 = vmul.f32 0.5, %v786
        %v788 = vsub.f32 1.5, %v787
        %v789 = vmul.f32 %v784, %v788
        %vm790 = vweird.f32 %v773
        %vm791 = vweird.f32 %v784
        %vm792 = vmor %vm790, %vm791
        %v793 = vsel %vm792, %v784, %v789
        %v794 = vmul.f32 %v760, %v783
        %v795 = vmul.f32 %v761, %v793
        %v797 = vperm.slane %v742, 0
        %v799 = vmul.f32 %v794, %v797
        %v800 = vmul.f32 %v795, %v797
        %v802 = vperm.slane %v743, 0
        %v804 = vadd.f32 %v799, %v802
        %v805 = vadd.f32 %v800, %v802
        %v806 = vpack.c.bf16 %v805, %v804
        %v807 = vld [vmem:[%s699] sm:$0xf]
        %v808 = vld [vmem:[%s699 + $0x4] sm:$0xf]
        %v809 = vld [vmem:[%s699 + $0x8] sm:$0xf]
        %v810 = vld [vmem:[%s699 + $0xc] sm:$0xf]
        %v811 = vld [vmem:[%s702] sm:$0x1]
        %v813 = vperm.slane %v811, 0
        %v819 = vunpack.c.l.b16 %v807
        %v820 = vunpack.c.l.b16 %v808
        %v821 = vunpack.c.l.b16 %v809
        %v822 = vunpack.c.l.b16 %v810
        %v823 = vpack.c.b16 %v820, %v819
        %v824 = vpack.c.b16 %v822, %v821
        %v828 = vsel %vm744, %v806, 0
        %830 = vmatpush.bf16.msra.mxu0 0
        %831 = vmatpush.bf16.msra.mxu0 0
        %832 = vmatpush.bf16.msra.mxu0 0
        %833 = vmatpush.bf16.msra.mxu0 0
        %834 = vmatpush.bf16.msra.mxu0 0
        %835 = vmatpush.bf16.msra.mxu0 0
        %836 = vmatpush.bf16.msra.mxu0 %v824
        %837 = vmatpush.bf16.msra.mxu0 %v823
        %838 = vmatmul.bf16.gmra.mxu0 %v828
        %v839 = vpop.f32.mrf.mxu0
        %v840 = vadd.f32 %v813, %v839
        %v841 = vpop.f32.mrf.mxu0
        %v842 = vadd.f32 %v813, %v841
        %843 = vdwg.mxu0
        %846 = vrot.lane.b32.xlu0 %v840, 120
        %v847 = vpop.permute.xlu0 %846
        %848 = vrot.lane.b32.xlu0 %v842, 120
        %v849 = vpop.permute.xlu0 %848
        %852 = vrot.lane.b32.xlu0 %v840, 112
        %v853 = vpop.permute.xlu0 %852
        %854 = vrot.lane.b32.xlu0 %v842, 112
        %v855 = vpop.permute.xlu0 %854
        %858 = vrot.lane.b32.xlu0 %v840, 104
        %v859 = vpop.permute.xlu0 %858
        %860 = vrot.lane.b32.xlu0 %v842, 104
        %v861 = vpop.permute.xlu0 %860
        %v864 = vrot.slane %v853, 4
        %vm865 = vcmask 1047556
        %v866 = vsel %vm865, %v864, %v840
        %v867 = vrot.slane %v840, 4
        %v868 = vsel %vm865, %v853, %v867
        %v870 = vunpack.c.l.s4 1983009808
        %v871 = vunpack.c.0.s8 %v870
        %v872 = vperm.slane %v866, %v871
        %v874 = vunpack.c.l.s4 1983009808
        %v875 = vunpack.c.0.s8 %v874
        %v876 = vperm.slane %v868, %v875
        %v877 = vrot.slane %v859, 4
        %v878 = vsel %vm865, %v877, %v847
        %v879 = vrot.slane %v847, 4
        %v880 = vsel %vm865, %v859, %v879
        %v882 = vunpack.c.l.s4 1983009808
        %v883 = vunpack.c.0.s8 %v882
        %v884 = vperm.slane %v878, %v883
        %v886 = vunpack.c.l.s4 1983009808
        %v887 = vunpack.c.0.s8 %v886
        %v888 = vperm.slane %v880, %v887
        %v889 = vrot.slane %v884, 4
        %v890 = vsel %vm865, %v889, %v872
        %v891 = vrot.slane %v872, 4
        %v892 = vsel %vm865, %v884, %v891
        %v894 = vunpack.c.l.s4 1934713408
        %v895 = vunpack.c.0.s8 %v894
        %v896 = vperm.slane %v890, %v895
        %v898 = vunpack.c.l.s4 1934713408
        %v899 = vunpack.c.0.s8 %v898
        %v900 = vperm.slane %v892, %v899
        %v901 = vrot.slane %v888, 4
        %v902 = vsel %vm865, %v901, %v876
        %v903 = vrot.slane %v876, 4
        %v904 = vsel %vm865, %v888, %v903
        %v906 = vunpack.c.l.s4 1934713408
        %v907 = vunpack.c.0.s8 %v906
        %v908 = vperm.slane %v902, %v907
        %v910 = vunpack.c.l.s4 1934713408
        %v911 = vunpack.c.0.s8 %v910
        %v912 = vperm.slane %v904, %v911
        %v913 = vrot.slane %v896, 4
        %v914 = vsel %vm865, 0.0, %v913
        %v915 = vrot.slane %v900, 4
        %v916 = vsel %vm865, 0.0, %v915
        %v917 = vrot.slane %v908, 4
        %v918 = vsel %vm865, 0.0, %v917
        %v919 = vrot.slane %v912, 4
        %v920 = vsel %vm865, 0.0, %v919
        %v921 = vrot.slane %v855, 4
        %v922 = vsel %vm865, %v921, %v842
        %v923 = vrot.slane %v842, 4
        %v924 = vsel %vm865, %v855, %v923
        %v926 = vunpack.c.l.s4 1983009808
        %v927 = vunpack.c.0.s8 %v926
        %v928 = vperm.slane %v922, %v927
        %v930 = vunpack.c.l.s4 1983009808
        %v931 = vunpack.c.0.s8 %v930
        %v932 = vperm.slane %v924, %v931
        %v933 = vrot.slane %v861, 4
        %v934 = vsel %vm865, %v933, %v849
        %v935 = vrot.slane %v849, 4
        %v936 = vsel %vm865, %v861, %v935
        %v938 = vunpack.c.l.s4 1983009808
        %v939 = vunpack.c.0.s8 %v938
        %v940 = vperm.slane %v934, %v939
        %v942 = vunpack.c.l.s4 1983009808
        %v943 = vunpack.c.0.s8 %v942
        %v944 = vperm.slane %v936, %v943
        %v945 = vrot.slane %v940, 4
        %v946 = vsel %vm865, %v945, %v928
        %v947 = vrot.slane %v928, 4
        %v948 = vsel %vm865, %v940, %v947
        %v950 = vunpack.c.l.s4 1934713408
        %v951 = vunpack.c.0.s8 %v950
        %v952 = vperm.slane %v946, %v951
        %v954 = vunpack.c.l.s4 1934713408
        %v955 = vunpack.c.0.s8 %v954
        %v956 = vperm.slane %v948, %v955
        %v957 = vrot.slane %v944, 4
        %v958 = vsel %vm865, %v957, %v932
        %v959 = vrot.slane %v932, 4
        %v960 = vsel %vm865, %v944, %v959
        %v962 = vunpack.c.l.s4 1934713408
        %v963 = vunpack.c.0.s8 %v962
        %v964 = vperm.slane %v958, %v963
        %v966 = vunpack.c.l.s4 1934713408
        %v967 = vunpack.c.0.s8 %v966
        %v968 = vperm.slane %v960, %v967
        %v969 = vrot.slane %v952, 4
        %v970 = vsel %vm865, 0.0, %v969
        %v971 = vrot.slane %v956, 4
        %v972 = vsel %vm865, 0.0, %v971
        %v973 = vrot.slane %v964, 4
        %v974 = vsel %vm865, 0.0, %v973
        %v975 = vrot.slane %v968, 4
        %v976 = vsel %vm865, 0.0, %v975
        %v977 = vsel %vm865, %v915, %v896
        %v979 = vunpack.c.l.s4 1983009808
        %v980 = vunpack.c.0.s8 %v979
        %v981 = vperm.slane %v977, %v980
        %v982 = vrot.slane %v916, 4
        %v983 = vsel %vm865, %v982, %v914
        %v985 = vunpack.c.l.s4 1983009808
        %v986 = vunpack.c.0.s8 %v985
        %v987 = vperm.slane %v983, %v986
        %v988 = vsel %vm865, %v919, %v908
        %v990 = vunpack.c.l.s4 1983009808
        %v991 = vunpack.c.0.s8 %v990
        %v992 = vperm.slane %v988, %v991
        %v993 = vrot.slane %v920, 4
        %v994 = vsel %vm865, %v993, %v918
        %v996 = vunpack.c.l.s4 1983009808
        %v997 = vunpack.c.0.s8 %v996
        %v998 = vperm.slane %v994, %v997
        %v999 = vrot.slane %v987, 4
        %v1000 = vsel %vm865, %v999, %v981
        %v1001 = vrot.slane %v981, 4
        %v1002 = vsel %vm865, %v987, %v1001
        %v1004 = vunpack.c.l.s4 1934713408
        %v1005 = vunpack.c.0.s8 %v1004
        %v1006 = vperm.slane %v1000, %v1005
        %v1008 = vunpack.c.l.s4 1934713408
        %v1009 = vunpack.c.0.s8 %v1008
        %v1010 = vperm.slane %v1002, %v1009
        %v1011 = vrot.slane %v998, 4
        %v1012 = vsel %vm865, %v1011, %v992
        %v1013 = vrot.slane %v992, 4
        %v1014 = vsel %vm865, %v998, %v1013
        %v1016 = vunpack.c.l.s4 1934713408
        %v1017 = vunpack.c.0.s8 %v1016
        %v1018 = vperm.slane %v1012, %v1017
        %v1020 = vunpack.c.l.s4 1934713408
        %v1021 = vunpack.c.0.s8 %v1020
        %v1022 = vperm.slane %v1014, %v1021
        %v1023 = vrot.slane %v1018, 4
        %v1024 = vsel %vm865, %v1023, %v1006
        %v1025 = vrot.slane %v1006, 4
        %v1026 = vsel %vm865, %v1018, %v1025
        %v1027 = vrot.slane %v1022, 4
        %v1028 = vsel %vm865, %v1027, %v1010
        %v1029 = vrot.slane %v1010, 4
        %v1030 = vsel %vm865, %v1022, %v1029
        %v1031 = vsel %vm865, %v971, %v952
        %v1033 = vunpack.c.l.s4 1983009808
        %v1034 = vunpack.c.0.s8 %v1033
        %v1035 = vperm.slane %v1031, %v1034
        %v1036 = vrot.slane %v972, 4
        %v1037 = vsel %vm865, %v1036, %v970
        %v1039 = vunpack.c.l.s4 1983009808
        %v1040 = vunpack.c.0.s8 %v1039
        %v1041 = vperm.slane %v1037, %v1040
        %v1042 = vsel %vm865, %v975, %v964
        %v1044 = vunpack.c.l.s4 1983009808
        %v1045 = vunpack.c.0.s8 %v1044
        %v1046 = vperm.slane %v1042, %v1045
        %v1047 = vrot.slane %v976, 4
        %v1048 = vsel %vm865, %v1047, %v974
        %v1050 = vunpack.c.l.s4 1983009808
        %v1051 = vunpack.c.0.s8 %v1050
        %v1052 = vperm.slane %v1048, %v1051
        %v1053 = vrot.slane %v1041, 4
        %v1054 = vsel %vm865, %v1053, %v1035
        %v1055 = vrot.slane %v1035, 4
        %v1056 = vsel %vm865, %v1041, %v1055
        %v1058 = vunpack.c.l.s4 1934713408
        %v1059 = vunpack.c.0.s8 %v1058
        %v1060 = vperm.slane %v1054, %v1059
        %v1062 = vunpack.c.l.s4 1934713408
        %v1063 = vunpack.c.0.s8 %v1062
        %v1064 = vperm.slane %v1056, %v1063
        %v1065 = vrot.slane %v1052, 4
        %v1066 = vsel %vm865, %v1065, %v1046
        %v1067 = vrot.slane %v1046, 4
        %v1068 = vsel %vm865, %v1052, %v1067
        %v1070 = vunpack.c.l.s4 1934713408
        %v1071 = vunpack.c.0.s8 %v1070
        %v1072 = vperm.slane %v1066, %v1071
        %v1074 = vunpack.c.l.s4 1934713408
        %v1075 = vunpack.c.0.s8 %v1074
        %v1076 = vperm.slane %v1068, %v1075
        %v1077 = vrot.slane %v1072, 4
        %v1078 = vsel %vm865, %v1077, %v1060
        %v1079 = vrot.slane %v1060, 4
        %v1080 = vsel %vm865, %v1072, %v1079
        %v1081 = vrot.slane %v1076, 4
        %v1082 = vsel %vm865, %v1081, %v1064
        %v1083 = vrot.slane %v1064, 4
        %v1084 = vsel %vm865, %v1076, %v1083
        %v1085 = vpack.c.bf16 %v1024, %v1024
        %v1086 = vpack.c.bf16 %v1026, %v1026
        %v1087 = vpack.c.bf16 %v1028, %v1028
        %v1088 = vpack.c.bf16 %v1030, %v1030
        %v1089 = vpack.c.bf16 %v1078, %v1078
        %v1090 = vpack.c.bf16 %v1080, %v1080
        %v1091 = vpack.c.bf16 %v1082, %v1082
        %v1092 = vpack.c.bf16 %v1084, %v1084
        %1093 = vrot.lane.b32.xlu0 %v840, 96
        %v1094 = vpop.permute.xlu0 %1093
        %1095 = vrot.lane.b32.xlu0 %v842, 96
        %v1096 = vpop.permute.xlu0 %1095
        %1097 = vrot.lane.b32.xlu0 %v847, 96
        %v1098 = vpop.permute.xlu0 %1097
        %1099 = vrot.lane.b32.xlu0 %v849, 96
        %v1100 = vpop.permute.xlu0 %1099
        %1101 = vrot.lane.b32.xlu0 %v853, 96
        %v1102 = vpop.permute.xlu0 %1101
        %1103 = vrot.lane.b32.xlu0 %v855, 96
        %v1104 = vpop.permute.xlu0 %1103
        %1105 = vrot.lane.b32.xlu0 %v859, 96
        %v1106 = vpop.permute.xlu0 %1105
        %1107 = vrot.lane.b32.xlu0 %v861, 96
        %v1108 = vpop.permute.xlu0 %1107
        %v1117 = vrot.slane %v1102, 4
        %v1118 = vsel %vm865, %v1117, %v1094
        %v1119 = vrot.slane %v1094, 4
        %v1120 = vsel %vm865, %v1102, %v1119
        %v1122 = vunpack.c.l.s4 1983009808
        %v1123 = vunpack.c.0.s8 %v1122
        %v1124 = vperm.slane %v1118, %v1123
        %v1126 = vunpack.c.l.s4 1983009808
        %v1127 = vunpack.c.0.s8 %v1126
        %v1128 = vperm.slane %v1120, %v1127
        %v1129 = vrot.slane %v1106, 4
        %v1130 = vsel %vm865, %v1129, %v1098
        %v1131 = vrot.slane %v1098, 4
        %v1132 = vsel %vm865, %v1106, %v1131
        %v1134 = vunpack.c.l.s4 1983009808
        %v1135 = vunpack.c.0.s8 %v1134
        %v1136 = vperm.slane %v1130, %v1135
        %v1138 = vunpack.c.l.s4 1983009808
        %v1139 = vunpack.c.0.s8 %v1138
        %v1140 = vperm.slane %v1132, %v1139
        %v1141 = vrot.slane %v1136, 4
        %v1142 = vsel %vm865, %v1141, %v1124
        %v1143 = vrot.slane %v1124, 4
        %v1144 = vsel %vm865, %v1136, %v1143
        %v1146 = vunpack.c.l.s4 1934713408
        %v1147 = vunpack.c.0.s8 %v1146
        %v1148 = vperm.slane %v1142, %v1147
        %v1150 = vunpack.c.l.s4 1934713408
        %v1151 = vunpack.c.0.s8 %v1150
        %v1152 = vperm.slane %v1144, %v1151
        %v1153 = vrot.slane %v1140, 4
        %v1154 = vsel %vm865, %v1153, %v1128
        %v1155 = vrot.slane %v1128, 4
        %v1156 = vsel %vm865, %v1140, %v1155
        %v1158 = vunpack.c.l.s4 1934713408
        %v1159 = vunpack.c.0.s8 %v1158
        %v1160 = vperm.slane %v1154, %v1159
        %v1162 = vunpack.c.l.s4 1934713408
        %v1163 = vunpack.c.0.s8 %v1162
        %v1164 = vperm.slane %v1156, %v1163
        %v1165 = vrot.slane %v1148, 4
        %v1166 = vsel %vm865, 0.0, %v1165
        %v1167 = vrot.slane %v1152, 4
        %v1168 = vsel %vm865, 0.0, %v1167
        %v1169 = vrot.slane %v1160, 4
        %v1170 = vsel %vm865, 0.0, %v1169
        %v1171 = vrot.slane %v1164, 4
        %v1172 = vsel %vm865, 0.0, %v1171
        %v1173 = vrot.slane %v1104, 4
        %v1174 = vsel %vm865, %v1173, %v1096
        %v1175 = vrot.slane %v1096, 4
        %v1176 = vsel %vm865, %v1104, %v1175
        %v1178 = vunpack.c.l.s4 1983009808
        %v1179 = vunpack.c.0.s8 %v1178
        %v1180 = vperm.slane %v1174, %v1179
        %v1182 = vunpack.c.l.s4 1983009808
        %v1183 = vunpack.c.0.s8 %v1182
        %v1184 = vperm.slane %v1176, %v1183
        %v1185 = vrot.slane %v1108, 4
        %v1186 = vsel %vm865, %v1185, %v1100
        %v1187 = vrot.slane %v1100, 4
        %v1188 = vsel %vm865, %v1108, %v1187
        %v1190 = vunpack.c.l.s4 1983009808
        %v1191 = vunpack.c.0.s8 %v1190
        %v1192 = vperm.slane %v1186, %v1191
        %v1194 = vunpack.c.l.s4 1983009808
        %v1195 = vunpack.c.0.s8 %v1194
        %v1196 = vperm.slane %v1188, %v1195
        %v1197 = vrot.slane %v1192, 4
        %v1198 = vsel %vm865, %v1197, %v1180
        %v1199 = vrot.slane %v1180, 4
        %v1200 = vsel %vm865, %v1192, %v1199
        %v1202 = vunpack.c.l.s4 1934713408
        %v1203 = vunpack.c.0.s8 %v1202
        %v1204 = vperm.slane %v1198, %v1203
        %v1206 = vunpack.c.l.s4 1934713408
        %v1207 = vunpack.c.0.s8 %v1206
        %v1208 = vperm.slane %v1200, %v1207
        %v1209 = vrot.slane %v1196, 4
        %v1210 = vsel %vm865, %v1209, %v1184
        %v1211 = vrot.slane %v1184, 4
        %v1212 = vsel %vm865, %v1196, %v1211
        %v1214 = vunpack.c.l.s4 1934713408
        %v1215 = vunpack.c.0.s8 %v1214
        %v1216 = vperm.slane %v1210, %v1215
        %v1218 = vunpack.c.l.s4 1934713408
        %v1219 = vunpack.c.0.s8 %v1218
        %v1220 = vperm.slane %v1212, %v1219
        %v1221 = vrot.slane %v1204, 4
        %v1222 = vsel %vm865, 0.0, %v1221
        %v1223 = vrot.slane %v1208, 4
        %v1224 = vsel %vm865, 0.0, %v1223
        %v1225 = vrot.slane %v1216, 4
        %v1226 = vsel %vm865, 0.0, %v1225
        %v1227 = vrot.slane %v1220, 4
        %v1228 = vsel %vm865, 0.0, %v1227
        %v1229 = vsel %vm865, %v1167, %v1148
        %v1231 = vunpack.c.l.s4 1983009808
        %v1232 = vunpack.c.0.s8 %v1231
        %v1233 = vperm.slane %v1229, %v1232
        %v1234 = vrot.slane %v1168, 4
        %v1235 = vsel %vm865, %v1234, %v1166
        %v1237 = vunpack.c.l.s4 1983009808
        %v1238 = vunpack.c.0.s8 %v1237
        %v1239 = vperm.slane %v1235, %v1238
        %v1240 = vsel %vm865, %v1171, %v1160
        %v1242 = vunpack.c.l.s4 1983009808
        %v1243 = vunpack.c.0.s8 %v1242
        %v1244 = vperm.slane %v1240, %v1243
        %v1245 = vrot.slane %v1172, 4
        %v1246 = vsel %vm865, %v1245, %v1170
        %v1248 = vunpack.c.l.s4 1983009808
        %v1249 = vunpack.c.0.s8 %v1248
        %v1250 = vperm.slane %v1246, %v1249
        %v1251 = vrot.slane %v1239, 4
        %v1252 = vsel %vm865, %v1251, %v1233
        %v1253 = vrot.slane %v1233, 4
        %v1254 = vsel %vm865, %v1239, %v1253
        %v1256 = vunpack.c.l.s4 1934713408
        %v1257 = vunpack.c.0.s8 %v1256
        %v1258 = vperm.slane %v1252, %v1257
        %v1260 = vunpack.c.l.s4 1934713408
        %v1261 = vunpack.c.0.s8 %v1260
        %v1262 = vperm.slane %v1254, %v1261
        %v1263 = vrot.slane %v1250, 4
        %v1264 = vsel %vm865, %v1263, %v1244
        %v1265 = vrot.slane %v1244, 4
        %v1266 = vsel %vm865, %v1250, %v1265
        %v1268 = vunpack.c.l.s4 1934713408
        %v1269 = vunpack.c.0.s8 %v1268
        %v1270 = vperm.slane %v1264, %v1269
        %v1272 = vunpack.c.l.s4 1934713408
        %v1273 = vunpack.c.0.s8 %v1272
        %v1274 = vperm.slane %v1266, %v1273
        %v1275 = vrot.slane %v1270, 4
        %v1276 = vsel %vm865, %v1275, %v1258
        %v1277 = vrot.slane %v1258, 4
        %v1278 = vsel %vm865, %v1270, %v1277
        %v1279 = vrot.slane %v1274, 4
        %v1280 = vsel %vm865, %v1279, %v1262
        %v1281 = vrot.slane %v1262, 4
        %v1282 = vsel %vm865, %v1274, %v1281
        %v1283 = vsel %vm865, %v1223, %v1204
        %v1285 = vunpack.c.l.s4 1983009808
        %v1286 = vunpack.c.0.s8 %v1285
        %v1287 = vperm.slane %v1283, %v1286
        %v1288 = vrot.slane %v1224, 4
        %v1289 = vsel %vm865, %v1288, %v1222
        %v1291 = vunpack.c.l.s4 1983009808
        %v1292 = vunpack.c.0.s8 %v1291
        %v1293 = vperm.slane %v1289, %v1292
        %v1294 = vsel %vm865, %v1227, %v1216
        %v1296 = vunpack.c.l.s4 1983009808
        %v1297 = vunpack.c.0.s8 %v1296
        %v1298 = vperm.slane %v1294, %v1297
        %v1299 = vrot.slane %v1228, 4
        %v1300 = vsel %vm865, %v1299, %v1226
        %v1302 = vunpack.c.l.s4 1983009808
        %v1303 = vunpack.c.0.s8 %v1302
        %v1304 = vperm.slane %v1300, %v1303
        %v1305 = vrot.slane %v1293, 4
        %v1306 = vsel %vm865, %v1305, %v1287
        %v1307 = vrot.slane %v1287, 4
        %v1308 = vsel %vm865, %v1293, %v1307
        %v1310 = vunpack.c.l.s4 1934713408
        %v1311 = vunpack.c.0.s8 %v1310
        %v1312 = vperm.slane %v1306, %v1311
        %v1314 = vunpack.c.l.s4 1934713408
        %v1315 = vunpack.c.0.s8 %v1314
        %v1316 = vperm.slane %v1308, %v1315
        %v1317 = vrot.slane %v1304, 4
        %v1318 = vsel %vm865, %v1317, %v1298
        %v1319 = vrot.slane %v1298, 4
        %v1320 = vsel %vm865, %v1304, %v1319
        %v1322 = vunpack.c.l.s4 1934713408
        %v1323 = vunpack.c.0.s8 %v1322
        %v1324 = vperm.slane %v1318, %v1323
        %v1326 = vunpack.c.l.s4 1934713408
        %v1327 = vunpack.c.0.s8 %v1326
        %v1328 = vperm.slane %v1320, %v1327
        %v1329 = vrot.slane %v1324, 4
        %v1330 = vsel %vm865, %v1329, %v1312
        %v1331 = vrot.slane %v1312, 4
        %v1332 = vsel %vm865, %v1324, %v1331
        %v1333 = vrot.slane %v1328, 4
        %v1334 = vsel %vm865, %v1333, %v1316
        %v1335 = vrot.slane %v1316, 4
        %v1336 = vsel %vm865, %v1328, %v1335
        %v1337 = vpack.c.bf16 %v1276, %v1276
        %v1338 = vpack.c.bf16 %v1278, %v1278
        %v1339 = vpack.c.bf16 %v1280, %v1280
        %v1340 = vpack.c.bf16 %v1282, %v1282
        %v1341 = vpack.c.bf16 %v1330, %v1330
        %v1342 = vpack.c.bf16 %v1332, %v1332
        %v1343 = vpack.c.bf16 %v1334, %v1334
        %v1344 = vpack.c.bf16 %v1336, %v1336
        %1345 = vrot.lane.b32.xlu0 %v840, 64
        %v1346 = vpop.permute.xlu0 %1345
        %1347 = vrot.lane.b32.xlu0 %v842, 64
        %v1348 = vpop.permute.xlu0 %1347
        %1349 = vrot.lane.b32.xlu0 %v847, 64
        %v1350 = vpop.permute.xlu0 %1349
        %1351 = vrot.lane.b32.xlu0 %v849, 64
        %v1352 = vpop.permute.xlu0 %1351
        %1353 = vrot.lane.b32.xlu0 %v853, 64
        %v1354 = vpop.permute.xlu0 %1353
        %1355 = vrot.lane.b32.xlu0 %v855, 64
        %v1356 = vpop.permute.xlu0 %1355
        %1357 = vrot.lane.b32.xlu0 %v859, 64
        %v1358 = vpop.permute.xlu0 %1357
        %1359 = vrot.lane.b32.xlu0 %v861, 64
        %v1360 = vpop.permute.xlu0 %1359
        %v1369 = vrot.slane %v1354, 4
        %v1370 = vsel %vm865, %v1369, %v1346
        %v1371 = vrot.slane %v1346, 4
        %v1372 = vsel %vm865, %v1354, %v1371
        %v1374 = vunpack.c.l.s4 1983009808
        %v1375 = vunpack.c.0.s8 %v1374
        %v1376 = vperm.slane %v1370, %v1375
        %v1378 = vunpack.c.l.s4 1983009808
        %v1379 = vunpack.c.0.s8 %v1378
        %v1380 = vperm.slane %v1372, %v1379
        %v1381 = vrot.slane %v1358, 4
        %v1382 = vsel %vm865, %v1381, %v1350
        %v1383 = vrot.slane %v1350, 4
        %v1384 = vsel %vm865, %v1358, %v1383
        %v1386 = vunpack.c.l.s4 1983009808
        %v1387 = vunpack.c.0.s8 %v1386
        %v1388 = vperm.slane %v1382, %v1387
        %v1390 = vunpack.c.l.s4 1983009808
        %v1391 = vunpack.c.0.s8 %v1390
        %v1392 = vperm.slane %v1384, %v1391
        %v1393 = vrot.slane %v1388, 4
        %v1394 = vsel %vm865, %v1393, %v1376
        %v1395 = vrot.slane %v1376, 4
        %v1396 = vsel %vm865, %v1388, %v1395
        %v1398 = vunpack.c.l.s4 1934713408
        %v1399 = vunpack.c.0.s8 %v1398
        %v1400 = vperm.slane %v1394, %v1399
        %v1402 = vunpack.c.l.s4 1934713408
        %v1403 = vunpack.c.0.s8 %v1402
        %v1404 = vperm.slane %v1396, %v1403
        %v1405 = vrot.slane %v1392, 4
        %v1406 = vsel %vm865, %v1405, %v1380
        %v1407 = vrot.slane %v1380, 4
        %v1408 = vsel %vm865, %v1392, %v1407
        %v1410 = vunpack.c.l.s4 1934713408
        %v1411 = vunpack.c.0.s8 %v1410
        %v1412 = vperm.slane %v1406, %v1411
        %v1414 = vunpack.c.l.s4 1934713408
        %v1415 = vunpack.c.0.s8 %v1414
        %v1416 = vperm.slane %v1408, %v1415
        %v1417 = vrot.slane %v1400, 4
        %v1418 = vsel %vm865, 0.0, %v1417
        %v1419 = vrot.slane %v1404, 4
        %v1420 = vsel %vm865, 0.0, %v1419
        %v1421 = vrot.slane %v1412, 4
        %v1422 = vsel %vm865, 0.0, %v1421
        %v1423 = vrot.slane %v1416, 4
        %v1424 = vsel %vm865, 0.0, %v1423
        %v1425 = vrot.slane %v1356, 4
        %v1426 = vsel %vm865, %v1425, %v1348
        %v1427 = vrot.slane %v1348, 4
        %v1428 = vsel %vm865, %v1356, %v1427
        %v1430 = vunpack.c.l.s4 1983009808
        %v1431 = vunpack.c.0.s8 %v1430
        %v1432 = vperm.slane %v1426, %v1431
        %v1434 = vunpack.c.l.s4 1983009808
        %v1435 = vunpack.c.0.s8 %v1434
        %v1436 = vperm.slane %v1428, %v1435
        %v1437 = vrot.slane %v1360, 4
        %v1438 = vsel %vm865, %v1437, %v1352
        %v1439 = vrot.slane %v1352, 4
        %v1440 = vsel %vm865, %v1360, %v1439
        %v1442 = vunpack.c.l.s4 1983009808
        %v1443 = vunpack.c.0.s8 %v1442
        %v1444 = vperm.slane %v1438, %v1443
        %v1446 = vunpack.c.l.s4 1983009808
        %v1447 = vunpack.c.0.s8 %v1446
        %v1448 = vperm.slane %v1440, %v1447
        %v1449 = vrot.slane %v1444, 4
        %v1450 = vsel %vm865, %v1449, %v1432
        %v1451 = vrot.slane %v1432, 4
        %v1452 = vsel %vm865, %v1444, %v1451
        %v1454 = vunpack.c.l.s4 1934713408
        %v1455 = vunpack.c.0.s8 %v1454
        %v1456 = vperm.slane %v1450, %v1455
        %v1458 = vunpack.c.l.s4 1934713408
        %v1459 = vunpack.c.0.s8 %v1458
        %v1460 = vperm.slane %v1452, %v1459
        %v1461 = vrot.slane %v1448, 4
        %v1462 = vsel %vm865, %v1461, %v1436
        %v1463 = vrot.slane %v1436, 4
        %v1464 = vsel %vm865, %v1448, %v1463
        %v1466 = vunpack.c.l.s4 1934713408
        %v1467 = vunpack.c.0.s8 %v1466
        %v1468 = vperm.slane %v1462, %v1467
        %v1470 = vunpack.c.l.s4 1934713408
        %v1471 = vunpack.c.0.s8 %v1470
        %v1472 = vperm.slane %v1464, %v1471
        %v1473 = vrot.slane %v1456, 4
        %v1474 = vsel %vm865, 0.0, %v1473
        %v1475 = vrot.slane %v1460, 4
        %v1476 = vsel %vm865, 0.0, %v1475
        %v1477 = vrot.slane %v1468, 4
        %v1478 = vsel %vm865, 0.0, %v1477
        %v1479 = vrot.slane %v1472, 4
        %v1480 = vsel %vm865, 0.0, %v1479
        %v1481 = vsel %vm865, %v1419, %v1400
        %v1483 = vunpack.c.l.s4 1983009808
        %v1484 = vunpack.c.0.s8 %v1483
        %v1485 = vperm.slane %v1481, %v1484
        %v1486 = vrot.slane %v1420, 4
        %v1487 = vsel %vm865, %v1486, %v1418
        %v1489 = vunpack.c.l.s4 1983009808
        %v1490 = vunpack.c.0.s8 %v1489
        %v1491 = vperm.slane %v1487, %v1490
        %v1492 = vsel %vm865, %v1423, %v1412
        %v1494 = vunpack.c.l.s4 1983009808
        %v1495 = vunpack.c.0.s8 %v1494
        %v1496 = vperm.slane %v1492, %v1495
        %v1497 = vrot.slane %v1424, 4
        %v1498 = vsel %vm865, %v1497, %v1422
        %v1500 = vunpack.c.l.s4 1983009808
        %v1501 = vunpack.c.0.s8 %v1500
        %v1502 = vperm.slane %v1498, %v1501
        %v1503 = vrot.slane %v1491, 4
        %v1504 = vsel %vm865, %v1503, %v1485
        %v1505 = vrot.slane %v1485, 4
        %v1506 = vsel %vm865, %v1491, %v1505
        %v1508 = vunpack.c.l.s4 1934713408
        %v1509 = vunpack.c.0.s8 %v1508
        %v1510 = vperm.slane %v1504, %v1509
        %v1512 = vunpack.c.l.s4 1934713408
        %v1513 = vunpack.c.0.s8 %v1512
        %v1514 = vperm.slane %v1506, %v1513
        %v1515 = vrot.slane %v1502, 4
        %v1516 = vsel %vm865, %v1515, %v1496
        %v1517 = vrot.slane %v1496, 4
        %v1518 = vsel %vm865, %v1502, %v1517
        %v1520 = vunpack.c.l.s4 1934713408
        %v1521 = vunpack.c.0.s8 %v1520
        %v1522 = vperm.slane %v1516, %v1521
        %v1524 = vunpack.c.l.s4 1934713408
        %v1525 = vunpack.c.0.s8 %v1524
        %v1526 = vperm.slane %v1518, %v1525
        %v1527 = vrot.slane %v1522, 4
        %v1528 = vsel %vm865, %v1527, %v1510
        %v1529 = vrot.slane %v1510, 4
        %v1530 = vsel %vm865, %v1522, %v1529
        %v1531 = vrot.slane %v1526, 4
        %v1532 = vsel %vm865, %v1531, %v1514
        %v1533 = vrot.slane %v1514, 4
        %v1534 = vsel %vm865, %v1526, %v1533
        %v1535 = vsel %vm865, %v1475, %v1456
        %v1537 = vunpack.c.l.s4 1983009808
        %v1538 = vunpack.c.0.s8 %v1537
        %v1539 = vperm.slane %v1535, %v1538
        %v1540 = vrot.slane %v1476, 4
        %v1541 = vsel %vm865, %v1540, %v1474
        %v1543 = vunpack.c.l.s4 1983009808
        %v1544 = vunpack.c.0.s8 %v1543
        %v1545 = vperm.slane %v1541, %v1544
        %v1546 = vsel %vm865, %v1479, %v1468
        %v1548 = vunpack.c.l.s4 1983009808
        %v1549 = vunpack.c.0.s8 %v1548
        %v1550 = vperm.slane %v1546, %v1549
        %v1551 = vrot.slane %v1480, 4
        %v1552 = vsel %vm865, %v1551, %v1478
        %v1554 = vunpack.c.l.s4 1983009808
        %v1555 = vunpack.c.0.s8 %v1554
        %v1556 = vperm.slane %v1552, %v1555
        %v1557 = vrot.slane %v1545, 4
        %v1558 = vsel %vm865, %v1557, %v1539
        %v1559 = vrot.slane %v1539, 4
        %v1560 = vsel %vm865, %v1545, %v1559
        %v1562 = vunpack.c.l.s4 1934713408
        %v1563 = vunpack.c.0.s8 %v1562
        %v1564 = vperm.slane %v1558, %v1563
        %v1566 = vunpack.c.l.s4 1934713408
        %v1567 = vunpack.c.0.s8 %v1566
        %v1568 = vperm.slane %v1560, %v1567
        %v1569 = vrot.slane %v1556, 4
        %v1570 = vsel %vm865, %v1569, %v1550
        %v1571 = vrot.slane %v1550, 4
        %v1572 = vsel %vm865, %v1556, %v1571
        %v1574 = vunpack.c.l.s4 1934713408
        %v1575 = vunpack.c.0.s8 %v1574
        %v1576 = vperm.slane %v1570, %v1575
        %v1578 = vunpack.c.l.s4 1934713408
        %v1579 = vunpack.c.0.s8 %v1578
        %v1580 = vperm.slane %v1572, %v1579
        %v1581 = vrot.slane %v1576, 4
        %v1582 = vsel %vm865, %v1581, %v1564
        %v1583 = vrot.slane %v1564, 4
        %v1584 = vsel %vm865, %v1576, %v1583
        %v1585 = vrot.slane %v1580, 4
        %v1586 = vsel %vm865, %v1585, %v1568
        %v1587 = vrot.slane %v1568, 4
        %v1588 = vsel %vm865, %v1580, %v1587
        %v1589 = vpack.c.bf16 %v1528, %v1528
        %v1590 = vpack.c.bf16 %v1530, %v1530
        %v1591 = vpack.c.bf16 %v1532, %v1532
        %v1592 = vpack.c.bf16 %v1534, %v1534
        %v1593 = vpack.c.bf16 %v1582, %v1582
        %v1594 = vpack.c.bf16 %v1584, %v1584
        %v1595 = vpack.c.bf16 %v1586, %v1586
        %v1596 = vpack.c.bf16 %v1588, %v1588
        %vm1597 = vcmask 64512
        %v1599 = vsel %vm1597, %v1085, 0
        %v1602 = vsel %vm1597, %v1337, 0
        %1604 = vmatpush.bf16.xpose.msra.mxu0 0
        %1605 = vmatpush.bf16.xpose.msra.mxu0 0
        %1606 = vmatpush.bf16.xpose.msra.mxu0 0
        %1607 = vmatpush.bf16.xpose.msra.mxu0 0
        %1608 = vmatpush.bf16.xpose.msra.mxu0 0
        %1609 = vmatpush.bf16.xpose.msra.mxu0 0
        %1610 = vmatpush.bf16.xpose.msra.mxu0 0
        %1611 = vmatpush.bf16.xpose.msra.mxu0 %v1602
        %1612 = vmatmul.bf16.gmra.mxu0 %v1599
        %v1613 = vpop.f32.mrf.mxu0
        %v1614 = vadd.f32 0.0, %v1613
        %v1615 = vpop.f32.mrf.mxu0
        %1616 = vdwg.mxu0
        %v1618 = vsel %vm1597, %v1086, 0
        %v1621 = vsel %vm1597, %v1338, 0
        %1623 = vmatpush.bf16.xpose.msra.mxu0 0
        %1624 = vmatpush.bf16.xpose.msra.mxu0 0
        %1625 = vmatpush.bf16.xpose.msra.mxu0 0
        %1626 = vmatpush.bf16.xpose.msra.mxu0 0
        %1627 = vmatpush.bf16.xpose.msra.mxu0 0
        %1628 = vmatpush.bf16.xpose.msra.mxu0 0
        %1629 = vmatpush.bf16.xpose.msra.mxu0 0
        %1630 = vmatpush.bf16.xpose.msra.mxu0 %v1621
        %1631 = vmatmul.bf16.gmra.mxu0 %v1618
        %v1632 = vpop.f32.mrf.mxu0
        %v1633 = vadd.f32 0.0, %v1632
        %v1634 = vpop.f32.mrf.mxu0
        %1635 = vdwg.mxu0
        %v1637 = vsel %vm1597, %v1087, 0
        %v1640 = vsel %vm1597, %v1339, 0
        %1642 = vmatpush.bf16.xpose.msra.mxu0 0
        %1643 = vmatpush.bf16.xpose.msra.mxu0 0
        %1644 = vmatpush.bf16.xpose.msra.mxu0 0
        %1645 = vmatpush.bf16.xpose.msra.mxu0 0
        %1646 = vmatpush.bf16.xpose.msra.mxu0 0
        %1647 = vmatpush.bf16.xpose.msra.mxu0 0
        %1648 = vmatpush.bf16.xpose.msra.mxu0 0
        %1649 = vmatpush.bf16.xpose.msra.mxu0 %v1640
        %1650 = vmatmul.bf16.gmra.mxu0 %v1637
        %v1651 = vpop.f32.mrf.mxu0
        %v1652 = vadd.f32 0.0, %v1651
        %v1653 = vpop.f32.mrf.mxu0
        %1654 = vdwg.mxu0
        %v1656 = vsel %vm1597, %v1088, 0
        %v1659 = vsel %vm1597, %v1340, 0
        %1661 = vmatpush.bf16.xpose.msra.mxu0 0
        %1662 = vmatpush.bf16.xpose.msra.mxu0 0
        %1663 = vmatpush.bf16.xpose.msra.mxu0 0
        %1664 = vmatpush.bf16.xpose.msra.mxu0 0
        %1665 = vmatpush.bf16.xpose.msra.mxu0 0
        %1666 = vmatpush.bf16.xpose.msra.mxu0 0
        %1667 = vmatpush.bf16.xpose.msra.mxu0 0
        %1668 = vmatpush.bf16.xpose.msra.mxu0 %v1659
        %1669 = vmatmul.bf16.gmra.mxu0 %v1656
        %v1670 = vpop.f32.mrf.mxu0
        %v1671 = vadd.f32 0.0, %v1670
        %v1672 = vpop.f32.mrf.mxu0
        %1673 = vdwg.mxu0
        %v1675 = vsel %vm1597, %v1089, 0
        %v1678 = vsel %vm1597, %v1341, 0
        %1680 = vmatpush.bf16.xpose.msra.mxu0 0
        %1681 = vmatpush.bf16.xpose.msra.mxu0 0
        %1682 = vmatpush.bf16.xpose.msra.mxu0 0
        %1683 = vmatpush.bf16.xpose.msra.mxu0 0
        %1684 = vmatpush.bf16.xpose.msra.mxu0 0
        %1685 = vmatpush.bf16.xpose.msra.mxu0 0
        %1686 = vmatpush.bf16.xpose.msra.mxu0 0
        %1687 = vmatpush.bf16.xpose.msra.mxu0 %v1678
        %1688 = vmatmul.bf16.gmra.mxu0 %v1675
        %v1689 = vpop.f32.mrf.mxu0
        %v1690 = vadd.f32 0.0, %v1689
        %v1691 = vpop.f32.mrf.mxu0
        %1692 = vdwg.mxu0
        %v1694 = vsel %vm1597, %v1090, 0
        %v1697 = vsel %vm1597, %v1342, 0
        %1699 = vmatpush.bf16.xpose.msra.mxu0 0
        %1700 = vmatpush.bf16.xpose.msra.mxu0 0
        %1701 = vmatpush.bf16.xpose.msra.mxu0 0
        %1702 = vmatpush.bf16.xpose.msra.mxu0 0
        %1703 = vmatpush.bf16.xpose.msra.mxu0 0
        %1704 = vmatpush.bf16.xpose.msra.mxu0 0
        %1705 = vmatpush.bf16.xpose.msra.mxu0 0
        %1706 = vmatpush.bf16.xpose.msra.mxu0 %v1697
        %1707 = vmatmul.bf16.gmra.mxu0 %v1694
        %v1708 = vpop.f32.mrf.mxu0
        %v1709 = vadd.f32 0.0, %v1708
        %v1710 = vpop.f32.mrf.mxu0
        %1711 = vdwg.mxu0
        %v1713 = vsel %vm1597, %v1091, 0
        %v1716 = vsel %vm1597, %v1343, 0
        %1718 = vmatpush.bf16.xpose.msra.mxu0 0
        %1719 = vmatpush.bf16.xpose.msra.mxu0 0
        %1720 = vmatpush.bf16.xpose.msra.mxu0 0
        %1721 = vmatpush.bf16.xpose.msra.mxu0 0
        %1722 = vmatpush.bf16.xpose.msra.mxu0 0
        %1723 = vmatpush.bf16.xpose.msra.mxu0 0
        %1724 = vmatpush.bf16.xpose.msra.mxu0 0
        %1725 = vmatpush.bf16.xpose.msra.mxu0 %v1716
        %1726 = vmatmul.bf16.gmra.mxu0 %v1713
        %v1727 = vpop.f32.mrf.mxu0
        %v1728 = vadd.f32 0.0, %v1727
        %v1729 = vpop.f32.mrf.mxu0
        %1730 = vdwg.mxu0
        %v1732 = vsel %vm1597, %v1092, 0
        %v1735 = vsel %vm1597, %v1344, 0
        %1737 = vmatpush.bf16.xpose.msra.mxu0 0
        %1738 = vmatpush.bf16.xpose.msra.mxu0 0
        %1739 = vmatpush.bf16.xpose.msra.mxu0 0
        %1740 = vmatpush.bf16.xpose.msra.mxu0 0
        %1741 = vmatpush.bf16.xpose.msra.mxu0 0
        %1742 = vmatpush.bf16.xpose.msra.mxu0 0
        %1743 = vmatpush.bf16.xpose.msra.mxu0 0
        %1744 = vmatpush.bf16.xpose.msra.mxu0 %v1735
        %1745 = vmatmul.bf16.gmra.mxu0 %v1732
        %v1746 = vpop.f32.mrf.mxu0
        %v1747 = vadd.f32 0.0, %v1746
        %v1748 = vpop.f32.mrf.mxu0
        %1749 = vdwg.mxu0
        %v1750 = vlaneseq
        %v1751 = vshrl.u32 %v1750, 7
        %v1752 = vlaneseq
        %v1753 = vand.u32 %v1752, 127
        %vm1754 = vcmp.ge.s32.totalorder %v1751, %v1753
        %v1755 = vsel %vm1754, 1, 0
        %vm1756 = vcmp.eq.s32.totalorder %v1755, 1
        %v1757 = vsel %vm1756, %v1614, -1e+09
        %v1758 = vsel %vm1756, %v1633, -1e+09
        %v1759 = vsel %vm1756, %v1652, -1e+09
        %v1760 = vsel %vm1756, %v1671, -1e+09
        %v1761 = vsel %vm1756, %v1690, -1e+09
        %v1762 = vsel %vm1756, %v1709, -1e+09
        %v1763 = vsel %vm1756, %v1728, -1e+09
        %v1764 = vsel %vm1756, %v1747, -1e+09
        %v1765 = vsel %vm1597, %v1757, -inf
        %1766 = vmax.xlane.f32.xlu0 %v1765
        %v1767 = vpop.xlane.xlu0 %1766
        %v1768 = vsel %vm1597, %v1758, -inf
        %1769 = vmax.xlane.f32.xlu0 %v1768
        %v1770 = vpop.xlane.xlu0 %1769
        %v1771 = vsel %vm1597, %v1759, -inf
        %1772 = vmax.xlane.f32.xlu0 %v1771
        %v1773 = vpop.xlane.xlu0 %1772
        %v1774 = vsel %vm1597, %v1760, -inf
        %1775 = vmax.xlane.f32.xlu0 %v1774
        %v1776 = vpop.xlane.xlu0 %1775
        %v1777 = vsel %vm1597, %v1761, -inf
        %1778 = vmax.xlane.f32.xlu0 %v1777
        %v1779 = vpop.xlane.xlu0 %1778
        %v1780 = vsel %vm1597, %v1762, -inf
        %1781 = vmax.xlane.f32.xlu0 %v1780
        %v1782 = vpop.xlane.xlu0 %1781
        %v1783 = vsel %vm1597, %v1763, -inf
        %1784 = vmax.xlane.f32.xlu0 %v1783
        %v1785 = vpop.xlane.xlu0 %1784
        %v1786 = vsel %vm1597, %v1764, -inf
        %1787 = vmax.xlane.f32.xlu0 %v1786
        %v1788 = vpop.xlane.xlu0 %1787
        %v1789 = vsub.f32 %v1757, %v1767
        %v1790 = vsub.f32 %v1758, %v1770
        %v1791 = vsub.f32 %v1759, %v1773
        %v1792 = vsub.f32 %v1760, %v1776
        %v1793 = vsub.f32 %v1761, %v1779
        %v1794 = vsub.f32 %v1762, %v1782
        %v1795 = vsub.f32 %v1763, %v1785
        %v1796 = vsub.f32 %v1764, %v1788
        %v1797 = vmul.f32 %v1789, 1.442695
        %v1798 = vpow.pop %v1797
        %v1799 = vmul.f32 %v1790, 1.442695
        %v1800 = vpow.pop %v1799
        %v1801 = vmul.f32 %v1791, 1.442695
        %v1802 = vpow.pop %v1801
        %v1803 = vmul.f32 %v1792, 1.442695
        %v1804 = vpow.pop %v1803
        %v1805 = vmul.f32 %v1793, 1.442695
        %v1806 = vpow.pop %v1805
        %v1807 = vmul.f32 %v1794, 1.442695
        %v1808 = vpow.pop %v1807
        %v1809 = vmul.f32 %v1795, 1.442695
        %v1810 = vpow.pop %v1809
        %v1811 = vmul.f32 %v1796, 1.442695
        %v1812 = vpow.pop %v1811
        %v1813 = vsel %vm1597, %v1798, 0.0
        %1814 = vadd.xlane.f32.xlu0 %v1813
        %v1815 = vpop.xlane.xlu0 %1814
        %v1816 = vsel %vm1597, %v1800, 0.0
        %1817 = vadd.xlane.f32.xlu0 %v1816
        %v1818 = vpop.xlane.xlu0 %1817
        %v1819 = vsel %vm1597, %v1802, 0.0
        %1820 = vadd.xlane.f32.xlu0 %v1819
        %v1821 = vpop.xlane.xlu0 %1820
        %v1822 = vsel %vm1597, %v1804, 0.0
        %1823 = vadd.xlane.f32.xlu0 %v1822
        %v1824 = vpop.xlane.xlu0 %1823
        %v1825 = vsel %vm1597, %v1806, 0.0
        %1826 = vadd.xlane.f32.xlu0 %v1825
        %v1827 = vpop.xlane.xlu0 %1826
        %v1828 = vsel %vm1597, %v1808, 0.0
        %1829 = vadd.xlane.f32.xlu0 %v1828
        %v1830 = vpop.xlane.xlu0 %1829
        %v1831 = vsel %vm1597, %v1810, 0.0
        %1832 = vadd.xlane.f32.xlu0 %v1831
        %v1833 = vpop.xlane.xlu0 %1832
        %v1834 = vsel %vm1597, %v1812, 0.0
        %1835 = vadd.xlane.f32.xlu0 %v1834
        %v1836 = vpop.xlane.xlu0 %1835
        %v1837 = vrcp.pop %v1815
        %v1838 = vrcp.pop %v1818
        %v1839 = vrcp.pop %v1821
        %v1840 = vrcp.pop %v1824
        %v1841 = vrcp.pop %v1827
        %v1842 = vrcp.pop %v1830
        %v1843 = vrcp.pop %v1833
        %v1844 = vrcp.pop %v1836
        %v1845 = vmul.f32 %v1798, %v1837
        %v1846 = vmul.f32 %v1800, %v1838
        %v1847 = vmul.f32 %v1802, %v1839
        %v1848 = vmul.f32 %v1804, %v1840
        %v1849 = vmul.f32 %v1806, %v1841
        %v1850 = vmul.f32 %v1808, %v1842
        %v1851 = vmul.f32 %v1810, %v1843
        %v1852 = vmul.f32 %v1812, %v1844
        %v1853 = vpack.c.bf16 %v1845, %v1845
        %v1854 = vpack.c.bf16 %v1846, %v1846
        %v1855 = vpack.c.bf16 %v1847, %v1847
        %v1856 = vpack.c.bf16 %v1848, %v1848
        %v1857 = vpack.c.bf16 %v1849, %v1849
        %v1858 = vpack.c.bf16 %v1850, %v1850
        %v1859 = vpack.c.bf16 %v1851, %v1851
        %v1860 = vpack.c.bf16 %v1852, %v1852
        %v1862 = vsel %vm1597, %v1853, 0
        %vm1864 = vcmask 1043456
        %v1866 = vsel %vm1864, %v1589, 0
        %1868 = vmatpush.bf16.msra.mxu0 0
        %1869 = vmatpush.bf16.msra.mxu0 0
        %1870 = vmatpush.bf16.msra.mxu0 0
        %1871 = vmatpush.bf16.msra.mxu0 0
        %1872 = vmatpush.bf16.msra.mxu0 0
        %1873 = vmatpush.bf16.msra.mxu0 0
        %1874 = vmatpush.bf16.msra.mxu0 0
        %1875 = vmatpush.bf16.msra.mxu0 %v1866
        %1876 = vmatmul.bf16.gmra.mxu0 %v1862
        %v1877 = vpop.f32.mrf.mxu0
        %v1878 = vadd.f32 0.0, %v1877
        %v1879 = vpop.f32.mrf.mxu0
        %1880 = vdwg.mxu0
        %v1882 = vsel %vm1597, %v1854, 0
        %v1885 = vsel %vm1864, %v1590, 0
        %1887 = vmatpush.bf16.msra.mxu0 0
        %1888 = vmatpush.bf16.msra.mxu0 0
        %1889 = vmatpush.bf16.msra.mxu0 0
        %1890 = vmatpush.bf16.msra.mxu0 0
        %1891 = vmatpush.bf16.msra.mxu0 0
        %1892 = vmatpush.bf16.msra.mxu0 0
        %1893 = vmatpush.bf16.msra.mxu0 0
        %1894 = vmatpush.bf16.msra.mxu0 %v1885
        %1895 = vmatmul.bf16.gmra.mxu0 %v1882
        %v1896 = vpop.f32.mrf.mxu0
        %v1897 = vadd.f32 0.0, %v1896
        %v1898 = vpop.f32.mrf.mxu0
        %1899 = vdwg.mxu0
        %v1901 = vsel %vm1597, %v1855, 0
        %v1904 = vsel %vm1864, %v1591, 0
        %1906 = vmatpush.bf16.msra.mxu0 0
        %1907 = vmatpush.bf16.msra.mxu0 0
        %1908 = vmatpush.bf16.msra.mxu0 0
        %1909 = vmatpush.bf16.msra.mxu0 0
        %1910 = vmatpush.bf16.msra.mxu0 0
        %1911 = vmatpush.bf16.msra.mxu0 0
        %1912 = vmatpush.bf16.msra.mxu0 0
        %1913 = vmatpush.bf16.msra.mxu0 %v1904
        %1914 = vmatmul.bf16.gmra.mxu0 %v1901
        %v1915 = vpop.f32.mrf.mxu0
        %v1916 = vadd.f32 0.0, %v1915
        %v1917 = vpop.f32.mrf.mxu0
        %1918 = vdwg.mxu0
        %v1920 = vsel %vm1597, %v1856, 0
        %v1923 = vsel %vm1864, %v1592, 0
        %1925 = vmatpush.bf16.msra.mxu0 0
        %1926 = vmatpush.bf16.msra.mxu0 0
        %1927 = vmatpush.bf16.msra.mxu0 0
        %1928 = vmatpush.bf16.msra.mxu0 0
        %1929 = vmatpush.bf16.msra.mxu0 0
        %1930 = vmatpush.bf16.msra.mxu0 0
        %1931 = vmatpush.bf16.msra.mxu0 0
        %1932 = vmatpush.bf16.msra.mxu0 %v1923
        %1933 = vmatmul.bf16.gmra.mxu0 %v1920
        %v1934 = vpop.f32.mrf.mxu0
        %v1935 = vadd.f32 0.0, %v1934
        %v1936 = vpop.f32.mrf.mxu0
        %1937 = vdwg.mxu0
        %v1939 = vsel %vm1597, %v1857, 0
        %v1942 = vsel %vm1864, %v1593, 0
        %1944 = vmatpush.bf16.msra.mxu0 0
        %1945 = vmatpush.bf16.msra.mxu0 0
        %1946 = vmatpush.bf16.msra.mxu0 0
        %1947 = vmatpush.bf16.msra.mxu0 0
        %1948 = vmatpush.bf16.msra.mxu0 0
        %1949 = vmatpush.bf16.msra.mxu0 0
        %1950 = vmatpush.bf16.msra.mxu0 0
        %1951 = vmatpush.bf16.msra.mxu0 %v1942
        %1952 = vmatmul.bf16.gmra.mxu0 %v1939
        %v1953 = vpop.f32.mrf.mxu0
        %v1954 = vadd.f32 0.0, %v1953
        %v1955 = vpop.f32.mrf.mxu0
        %1956 = vdwg.mxu0
        %v1958 = vsel %vm1597, %v1858, 0
        %v1961 = vsel %vm1864, %v1594, 0
        %1963 = vmatpush.bf16.msra.mxu0 0
        %1964 = vmatpush.bf16.msra.mxu0 0
        %1965 = vmatpush.bf16.msra.mxu0 0
        %1966 = vmatpush.bf16.msra.mxu0 0
        %1967 = vmatpush.bf16.msra.mxu0 0
        %1968 = vmatpush.bf16.msra.mxu0 0
        %1969 = vmatpush.bf16.msra.mxu0 0
        %1970 = vmatpush.bf16.msra.mxu0 %v1961
        %1971 = vmatmul.bf16.gmra.mxu0 %v1958
        %v1972 = vpop.f32.mrf.mxu0
        %v1973 = vadd.f32 0.0, %v1972
        %v1974 = vpop.f32.mrf.mxu0
        %1975 = vdwg.mxu0
        %v1977 = vsel %vm1597, %v1859, 0
        %v1980 = vsel %vm1864, %v1595, 0
        %1982 = vmatpush.bf16.msra.mxu0 0
        %1983 = vmatpush.bf16.msra.mxu0 0
        %1984 = vmatpush.bf16.msra.mxu0 0
        %1985 = vmatpush.bf16.msra.mxu0 0
        %1986 = vmatpush.bf16.msra.mxu0 0
        %1987 = vmatpush.bf16.msra.mxu0 0
        %1988 = vmatpush.bf16.msra.mxu0 0
        %1989 = vmatpush.bf16.msra.mxu0 %v1980
        %1990 = vmatmul.bf16.gmra.mxu0 %v1977
        %v1991 = vpop.f32.mrf.mxu0
        %v1992 = vadd.f32 0.0, %v1991
        %v1993 = vpop.f32.mrf.mxu0
        %1994 = vdwg.mxu0
        %v1996 = vsel %vm1597, %v1860, 0
        %v1999 = vsel %vm1864, %v1596, 0
        %2001 = vmatpush.bf16.msra.mxu0 0
        %2002 = vmatpush.bf16.msra.mxu0 0
        %2003 = vmatpush.bf16.msra.mxu0 0
        %2004 = vmatpush.bf16.msra.mxu0 0
        %2005 = vmatpush.bf16.msra.mxu0 0
        %2006 = vmatpush.bf16.msra.mxu0 0
        %2007 = vmatpush.bf16.msra.mxu0 0
        %2008 = vmatpush.bf16.msra.mxu0 %v1999
        %2009 = vmatmul.bf16.gmra.mxu0 %v1996
        %v2010 = vpop.f32.mrf.mxu0
        %v2011 = vadd.f32 0.0, %v2010
        %v2012 = vpop.f32.mrf.mxu0
        %2013 = vdwg.mxu0
        %v2014 = vrot.slane %v1916, 4
        %v2015 = vsel %vm865, %v2014, %v1878
        %v2016 = vrot.slane %v1878, 4
        %v2017 = vsel %vm865, %v1916, %v2016
        %v2019 = vunpack.c.l.s4 1983009808
        %v2020 = vunpack.c.0.s8 %v2019
        %v2021 = vperm.slane %v2015, %v2020
        %v2023 = vunpack.c.l.s4 1983009808
        %v2024 = vunpack.c.0.s8 %v2023
        %v2025 = vperm.slane %v2017, %v2024
        %v2026 = vrot.slane %v1935, 4
        %v2027 = vsel %vm865, %v2026, %v1897
        %v2028 = vrot.slane %v1897, 4
        %v2029 = vsel %vm865, %v1935, %v2028
        %v2031 = vunpack.c.l.s4 1983009808
        %v2032 = vunpack.c.0.s8 %v2031
        %v2033 = vperm.slane %v2027, %v2032
        %v2035 = vunpack.c.l.s4 1983009808
        %v2036 = vunpack.c.0.s8 %v2035
        %v2037 = vperm.slane %v2029, %v2036
        %v2038 = vrot.slane %v2033, 4
        %v2039 = vsel %vm865, %v2038, %v2021
        %v2040 = vrot.slane %v2021, 4
        %v2041 = vsel %vm865, %v2033, %v2040
        %v2043 = vunpack.c.l.s4 1934713408
        %v2044 = vunpack.c.0.s8 %v2043
        %v2045 = vperm.slane %v2039, %v2044
        %v2047 = vunpack.c.l.s4 1934713408
        %v2048 = vunpack.c.0.s8 %v2047
        %v2049 = vperm.slane %v2041, %v2048
        %v2050 = vrot.slane %v2037, 4
        %v2051 = vsel %vm865, %v2050, %v2025
        %v2052 = vrot.slane %v2025, 4
        %v2053 = vsel %vm865, %v2037, %v2052
        %v2055 = vunpack.c.l.s4 1934713408
        %v2056 = vunpack.c.0.s8 %v2055
        %v2057 = vperm.slane %v2051, %v2056
        %v2059 = vunpack.c.l.s4 1934713408
        %v2060 = vunpack.c.0.s8 %v2059
        %v2061 = vperm.slane %v2053, %v2060
        %v2062 = vrot.slane %v2045, 4
        %v2063 = vsel %vm865, 0.0, %v2062
        %v2064 = vrot.slane %v2049, 4
        %v2065 = vsel %vm865, 0.0, %v2064
        %v2066 = vrot.slane %v2057, 4
        %v2067 = vsel %vm865, 0.0, %v2066
        %v2068 = vrot.slane %v2061, 4
        %v2069 = vsel %vm865, 0.0, %v2068
        %v2070 = vrot.slane %v1992, 4
        %v2071 = vsel %vm865, %v2070, %v1954
        %v2072 = vrot.slane %v1954, 4
        %v2073 = vsel %vm865, %v1992, %v2072
        %v2075 = vunpack.c.l.s4 1983009808
        %v2076 = vunpack.c.0.s8 %v2075
        %v2077 = vperm.slane %v2071, %v2076
        %v2079 = vunpack.c.l.s4 1983009808
        %v2080 = vunpack.c.0.s8 %v2079
        %v2081 = vperm.slane %v2073, %v2080
        %v2082 = vrot.slane %v2011, 4
        %v2083 = vsel %vm865, %v2082, %v1973
        %v2084 = vrot.slane %v1973, 4
        %v2085 = vsel %vm865, %v2011, %v2084
        %v2087 = vunpack.c.l.s4 1983009808
        %v2088 = vunpack.c.0.s8 %v2087
        %v2089 = vperm.slane %v2083, %v2088
        %v2091 = vunpack.c.l.s4 1983009808
        %v2092 = vunpack.c.0.s8 %v2091
        %v2093 = vperm.slane %v2085, %v2092
        %v2094 = vrot.slane %v2089, 4
        %v2095 = vsel %vm865, %v2094, %v2077
        %v2096 = vrot.slane %v2077, 4
        %v2097 = vsel %vm865, %v2089, %v2096
        %v2099 = vunpack.c.l.s4 1934713408
        %v2100 = vunpack.c.0.s8 %v2099
        %v2101 = vperm.slane %v2095, %v2100
        %v2103 = vunpack.c.l.s4 1934713408
        %v2104 = vunpack.c.0.s8 %v2103
        %v2105 = vperm.slane %v2097, %v2104
        %v2106 = vrot.slane %v2093, 4
        %v2107 = vsel %vm865, %v2106, %v2081
        %v2108 = vrot.slane %v2081, 4
        %v2109 = vsel %vm865, %v2093, %v2108
        %v2111 = vunpack.c.l.s4 1934713408
        %v2112 = vunpack.c.0.s8 %v2111
        %v2113 = vperm.slane %v2107, %v2112
        %v2115 = vunpack.c.l.s4 1934713408
        %v2116 = vunpack.c.0.s8 %v2115
        %v2117 = vperm.slane %v2109, %v2116
        %v2118 = vrot.slane %v2101, 4
        %v2119 = vsel %vm865, 0.0, %v2118
        %v2120 = vrot.slane %v2105, 4
        %v2121 = vsel %vm865, 0.0, %v2120
        %v2122 = vrot.slane %v2113, 4
        %v2123 = vsel %vm865, 0.0, %v2122
        %v2124 = vrot.slane %v2117, 4
        %v2125 = vsel %vm865, 0.0, %v2124
        %v2126 = vsel %vm865, %v2064, %v2045
        %v2128 = vunpack.c.l.s4 1983009808
        %v2129 = vunpack.c.0.s8 %v2128
        %v2130 = vperm.slane %v2126, %v2129
        %v2131 = vrot.slane %v2065, 4
        %v2132 = vsel %vm865, %v2131, %v2063
        %v2134 = vunpack.c.l.s4 1983009808
        %v2135 = vunpack.c.0.s8 %v2134
        %v2136 = vperm.slane %v2132, %v2135
        %v2137 = vsel %vm865, %v2068, %v2057
        %v2139 = vunpack.c.l.s4 1983009808
        %v2140 = vunpack.c.0.s8 %v2139
        %v2141 = vperm.slane %v2137, %v2140
        %v2142 = vrot.slane %v2069, 4
        %v2143 = vsel %vm865, %v2142, %v2067
        %v2145 = vunpack.c.l.s4 1983009808
        %v2146 = vunpack.c.0.s8 %v2145
        %v2147 = vperm.slane %v2143, %v2146
        %v2148 = vrot.slane %v2136, 4
        %v2149 = vsel %vm865, %v2148, %v2130
        %v2150 = vrot.slane %v2130, 4
        %v2151 = vsel %vm865, %v2136, %v2150
        %v2153 = vunpack.c.l.s4 1934713408
        %v2154 = vunpack.c.0.s8 %v2153
        %v2155 = vperm.slane %v2149, %v2154
        %v2157 = vunpack.c.l.s4 1934713408
        %v2158 = vunpack.c.0.s8 %v2157
        %v2159 = vperm.slane %v2151, %v2158
        %v2160 = vrot.slane %v2147, 4
        %v2161 = vsel %vm865, %v2160, %v2141
        %v2162 = vrot.slane %v2141, 4
        %v2163 = vsel %vm865, %v2147, %v2162
        %v2165 = vunpack.c.l.s4 1934713408
        %v2166 = vunpack.c.0.s8 %v2165
        %v2167 = vperm.slane %v2161, %v2166
        %v2169 = vunpack.c.l.s4 1934713408
        %v2170 = vunpack.c.0.s8 %v2169
        %v2171 = vperm.slane %v2163, %v2170
        %v2172 = vrot.slane %v2167, 4
        %v2173 = vsel %vm865, %v2172, %v2155
        %v2174 = vrot.slane %v2155, 4
        %v2175 = vsel %vm865, %v2167, %v2174
        %v2176 = vrot.slane %v2171, 4
        %v2177 = vsel %vm865, %v2176, %v2159
        %v2178 = vrot.slane %v2159, 4
        %v2179 = vsel %vm865, %v2171, %v2178
        %v2180 = vsel %vm865, %v2120, %v2101
        %v2182 = vunpack.c.l.s4 1983009808
        %v2183 = vunpack.c.0.s8 %v2182
        %v2184 = vperm.slane %v2180, %v2183
        %v2185 = vrot.slane %v2121, 4
        %v2186 = vsel %vm865, %v2185, %v2119
        %v2188 = vunpack.c.l.s4 1983009808
        %v2189 = vunpack.c.0.s8 %v2188
        %v2190 = vperm.slane %v2186, %v2189
        %v2191 = vsel %vm865, %v2124, %v2113
        %v2193 = vunpack.c.l.s4 1983009808
        %v2194 = vunpack.c.0.s8 %v2193
        %v2195 = vperm.slane %v2191, %v2194
        %v2196 = vrot.slane %v2125, 4
        %v2197 = vsel %vm865, %v2196, %v2123
        %v2199 = vunpack.c.l.s4 1983009808
        %v2200 = vunpack.c.0.s8 %v2199
        %v2201 = vperm.slane %v2197, %v2200
        %v2202 = vrot.slane %v2190, 4
        %v2203 = vsel %vm865, %v2202, %v2184
        %v2204 = vrot.slane %v2184, 4
        %v2205 = vsel %vm865, %v2190, %v2204
        %v2207 = vunpack.c.l.s4 1934713408
        %v2208 = vunpack.c.0.s8 %v2207
        %v2209 = vperm.slane %v2203, %v2208
        %v2211 = vunpack.c.l.s4 1934713408
        %v2212 = vunpack.c.0.s8 %v2211
        %v2213 = vperm.slane %v2205, %v2212
        %v2214 = vrot.slane %v2201, 4
        %v2215 = vsel %vm865, %v2214, %v2195
        %v2216 = vrot.slane %v2195, 4
        %v2217 = vsel %vm865, %v2201, %v2216
        %v2219 = vunpack.c.l.s4 1934713408
        %v2220 = vunpack.c.0.s8 %v2219
        %v2221 = vperm.slane %v2215, %v2220
        %v2223 = vunpack.c.l.s4 1934713408
        %v2224 = vunpack.c.0.s8 %v2223
        %v2225 = vperm.slane %v2217, %v2224
        %v2226 = vrot.slane %v2221, 4
        %v2227 = vsel %vm865, %v2226, %v2209
        %v2228 = vrot.slane %v2209, 4
        %v2229 = vsel %vm865, %v2221, %v2228
        %v2230 = vrot.slane %v2225, 4
        %v2231 = vsel %vm865, %v2230, %v2213
        %v2232 = vrot.slane %v2213, 4
        %v2233 = vsel %vm865, %v2225, %v2232
        %2236 = vrot.lane.b32.xlu0 %v2175, 8
        %v2237 = vpop.permute.xlu0 %2236
        %2238 = vrot.lane.b32.xlu0 %v2229, 8
        %v2239 = vpop.permute.xlu0 %2238
        %2244 = vrot.lane.b32.xlu0 %v2177, 16
        %v2245 = vpop.permute.xlu0 %2244
        %2246 = vrot.lane.b32.xlu0 %v2231, 16
        %v2247 = vpop.permute.xlu0 %2246
        %2252 = vrot.lane.b32.xlu0 %v2179, 24
        %v2253 = vpop.permute.xlu0 %2252
        %2254 = vrot.lane.b32.xlu0 %v2233, 24
        %v2255 = vpop.permute.xlu0 %2254
        %v2258 = vsel %vm1597, %v2173, %v2237
        %v2259 = vsel %vm1597, %v2227, %v2239
        %vm2260 = vcmask 130048
        %v2261 = vsel %vm2260, %v2258, %v2245
        %v2262 = vsel %vm2260, %v2259, %v2247
        %vm2263 = vcmask 195584
        %v2264 = vsel %vm2263, %v2261, %v2253
        %v2265 = vsel %vm2263, %v2262, %v2255
        %v2266 = vpack.c.bf16 %v2265, %v2264
        %v2267 = vld [vmem:[%s707] sm:$0xf]
        %v2268 = vld [vmem:[%s707 + $0x4] sm:$0xf]
        %v2269 = vld [vmem:[%s707 + $0x8] sm:$0xf]
        %v2270 = vld [vmem:[%s707 + $0xc] sm:$0xf]
        %v2271 = vld [vmem:[%s710] sm:$0x1]
        %v2273 = vperm.slane %v2271, 0
        %v2279 = vunpack.c.l.b16 %v2267
        %v2280 = vunpack.c.l.b16 %v2268
        %v2281 = vunpack.c.l.b16 %v2269
        %v2282 = vunpack.c.l.b16 %v2270
        %v2283 = vpack.c.b16 %v2280, %v2279
        %v2284 = vpack.c.b16 %v2282, %v2281
        %v2288 = vsel %vm744, %v2266, 0
        %2290 = vmatpush.bf16.msra.mxu0 0
        %2291 = vmatpush.bf16.msra.mxu0 0
        %2292 = vmatpush.bf16.msra.mxu0 0
        %2293 = vmatpush.bf16.msra.mxu0 0
        %2294 = vmatpush.bf16.msra.mxu0 0
        %2295 = vmatpush.bf16.msra.mxu0 0
        %2296 = vmatpush.bf16.msra.mxu0 %v2284
        %2297 = vmatpush.bf16.msra.mxu0 %v2283
        %2298 = vmatmul.bf16.gmra.mxu0 %v2288
        %v2299 = vpop.f32.mrf.mxu0
        %v2300 = vadd.f32 %v2273, %v2299
        %v2301 = vpop.f32.mrf.mxu0
        %v2302 = vadd.f32 %v2273, %v2301
        %2303 = vdwg.mxu0
        %v2304 = vadd.f32 %v740, %v2300
        %v2305 = vadd.f32 %v741, %v2302
        %v2306 = vld [vmem:[%s610] sm:$0x1]
        %v2307 = vld [vmem:[%s713] sm:$0x1]
        %v2308 = vsel %vm744, %v2304, 0.0
        %2309 = vadd.xlane.f32.xlu0 %v2308
        %v2310 = vpop.xlane.xlu0 %2309
        %v2311 = vsel %vm744, %v2305, 0.0
        %2312 = vadd.xlane.f32.xlu0 %v2311
        %v2313 = vpop.xlane.xlu0 %2312
        %v2314 = vmul.f32 %v2310, %v757
        %v2315 = vmul.f32 %v2313, %v757
        %v2316 = vsub.f32 %v2304, %v2314
        %v2317 = vsub.f32 %v2305, %v2315
        %v2318 = vmul.f32 %v2316, %v2316
        %v2319 = vmul.f32 %v2317, %v2317
        %v2320 = vsel %vm744, %v2318, 0.0
        %2321 = vadd.xlane.f32.xlu0 %v2320
        %v2322 = vpop.xlane.xlu0 %2321
        %v2323 = vsel %vm744, %v2319, 0.0
        %2324 = vadd.xlane.f32.xlu0 %v2323
        %v2325 = vpop.xlane.xlu0 %2324
        %v2326 = vmul.f32 %v2322, %v757
        %v2327 = vmul.f32 %v2325, %v757
        %v2328 = vadd.f32 %v2326, 1e-05
        %v2329 = vadd.f32 %v2327, 1e-05
        %v2330 = vrsqrt.pop %v2328
        %v2331 = vmul.f32 %v2330, %v2328
        %v2332 = vmul.f32 %v2331, %v2330
        %v2333 = vmul.f32 0.5, %v2332
        %v2334 = vsub.f32 1.5, %v2333
        %v2335 = vmul.f32 %v2330, %v2334
        %vm2336 = vweird.f32 %v2328
        %vm2337 = vweird.f32 %v2330
        %vm2338 = vmor %vm2336, %vm2337
        %v2339 = vsel %vm2338, %v2330, %v2335
        %v2340 = vrsqrt.pop %v2329
        %v2341 = vmul.f32 %v2340, %v2329
        %v2342 = vmul.f32 %v2341, %v2340
        %v2343 = vmul.f32 0.5, %v2342
        %v2344 = vsub.f32 1.5, %v2343
        %v2345 = vmul.f32 %v2340, %v2344
        %vm2346 = vweird.f32 %v2329
        %vm2347 = vweird.f32 %v2340
        %vm2348 = vmor %vm2346, %vm2347
        %v2349 = vsel %vm2348, %v2340, %v2345
        %v2350 = vmul.f32 %v2316, %v2339
        %v2351 = vmul.f32 %v2317, %v2349
        %v2353 = vperm.slane %v2306, 0
        %v2355 = vmul.f32 %v2350, %v2353
        %v2356 = vmul.f32 %v2351, %v2353
        %v2358 = vperm.slane %v2307, 0
        %v2360 = vadd.f32 %v2355, %v2358
        %v2361 = vadd.f32 %v2356, %v2358
        %v2362 = vpack.c.bf16 %v2361, %v2360
        %v2363 = vld [vmem:[%s718] sm:$0xf]
        %v2364 = vld [vmem:[%s718 + $0x4] sm:$0xf]
        %v2365 = vld [vmem:[%s718 + $0x8] sm:$0xf]
        %v2366 = vld [vmem:[%s718 + $0xc] sm:$0xf]
        %v2367 = vld [vmem:[%s721] sm:$0x1]
        %v2369 = vperm.slane %v2367, 0
        %v2375 = vunpack.c.l.b16 %v2363
        %v2376 = vunpack.c.l.b16 %v2364
        %v2377 = vunpack.c.l.b16 %v2365
        %v2378 = vunpack.c.l.b16 %v2366
        %v2379 = vpack.c.b16 %v2376, %v2375
        %v2380 = vpack.c.b16 %v2378, %v2377
        %v2384 = vsel %vm744, %v2362, 0
        %2386 = vmatpush.bf16.msra.mxu0 0
        %2387 = vmatpush.bf16.msra.mxu0 0
        %2388 = vmatpush.bf16.msra.mxu0 0
        %2389 = vmatpush.bf16.msra.mxu0 0
        %2390 = vmatpush.bf16.msra.mxu0 0
        %2391 = vmatpush.bf16.msra.mxu0 0
        %2392 = vmatpush.bf16.msra.mxu0 %v2380
        %2393 = vmatpush.bf16.msra.mxu0 %v2379
        %2394 = vmatmul.bf16.gmra.mxu0 %v2384
        %v2395 = vpop.f32.mrf.mxu0
        %v2396 = vadd.f32 %v2369, %v2395
        %v2397 = vpop.f32.mrf.mxu0
        %v2398 = vadd.f32 %v2369, %v2397
        %2399 = vdwg.mxu0
        %v2400 = vmul.f32 %v2396, %v2396
        %v2401 = vmul.f32 %v2398, %v2398
        %v2402 = vmul.f32 %v2396, %v2400
        %v2403 = vmul.f32 %v2398, %v2401
        %v2404 = vmul.f32 %v2402, 0.044715
        %v2405 = vmul.f32 %v2403, 0.044715
        %v2406 = vadd.f32 %v2396, %v2404
        %v2407 = vadd.f32 %v2398, %v2405
        %v2408 = vmul.f32 %v2406, 0.7978846
        %v2409 = vmul.f32 %v2407, 0.7978846
        %v2410 = vtanh.pop %v2408
        %v2411 = vtanh.pop %v2409
        %v2412 = vadd.f32 %v2410, 1.0
        %v2413 = vadd.f32 %v2411, 1.0
        %v2414 = vmul.f32 %v2412, 0.5
        %v2415 = vmul.f32 %v2413, 0.5
        %v2416 = vmul.f32 %v2396, %v2414
        %v2417 = vmul.f32 %v2398, %v2415
        %v2418 = vpack.c.bf16 %v2417, %v2416
        %v2419 = vld [vmem:[%s726] sm:$0xf]
        %v2420 = vld [vmem:[%s726 + $0x4] sm:$0xf]
        %v2421 = vld [vmem:[%s726 + $0x8] sm:$0xf]
        %v2422 = vld [vmem:[%s726 + $0xc] sm:$0xf]
        %v2423 = vld [vmem:[%s726 + $0x10] sm:$0xf]
        %v2424 = vld [vmem:[%s726 + $0x14] sm:$0xf]
        %v2425 = vld [vmem:[%s726 + $0x18] sm:$0xf]
        %v2426 = vld [vmem:[%s726 + $0x1c] sm:$0xf]
        %v2427 = vld [vmem:[%s729] sm:$0x1]
        %v2429 = vperm.slane %v2427, 0
        %v2439 = vunpack.c.l.b16 %v2419
        %v2440 = vunpack.c.l.b16 %v2420
        %v2441 = vunpack.c.l.b16 %v2421
        %v2442 = vunpack.c.l.b16 %v2422
        %v2443 = vunpack.c.l.b16 %v2423
        %v2444 = vunpack.c.l.b16 %v2424
        %v2445 = vunpack.c.l.b16 %v2425
        %v2446 = vunpack.c.l.b16 %v2426
        %v2447 = vpack.c.b16 %v2440, %v2439
        %v2448 = vpack.c.b16 %v2442, %v2441
        %v2449 = vpack.c.b16 %v2444, %v2443
        %v2450 = vpack.c.b16 %v2446, %v2445
        %vm2455 = vcmask 523264
        %v2457 = vsel %vm2455, %v2418, 0
        %2459 = vmatpush.bf16.msra.mxu0 0
        %2460 = vmatpush.bf16.msra.mxu0 0
        %2461 = vmatpush.bf16.msra.mxu0 0
        %2462 = vmatpush.bf16.msra.mxu0 0
        %2463 = vmatpush.bf16.msra.mxu0 %v2450
        %2464 = vmatpush.bf16.msra.mxu0 %v2449
        %2465 = vmatpush.bf16.msra.mxu0 %v2448
        %2466 = vmatpush.bf16.msra.mxu0 %v2447
        %2467 = vmatmul.bf16.gmra.mxu0 %v2457
        %v2468 = vpop.f32.mrf.mxu0
        %v2469 = vadd.f32 %v2429, %v2468
        %v2470 = vpop.f32.mrf.mxu0
        %v2471 = vadd.f32 %v2429, %v2470
        %2472 = vdwg.mxu0
        %v2473 = vadd.f32 %v2304, %v2469
        %v2474 = vadd.f32 %v2305, %v2471
        %2475 = vst.msk [vmem:[#allocation2] sm:$0xff] %vm744, %v2473
        %2476 = vst.msk [vmem:[#allocation2 + $0x8] sm:$0xff] %vm744, %v2474
        %p2477 = scmp.eq.s32.totalorder %s34, 1
        // Predicated region
        $region101: #{tpu_custom_call.1} parent=79 // pred_check
          %p2478 = pneg %p2477
        $region102: #{tpu_custom_call.1} parent=79 // pred_check_branch
          %2480 = sbr.rel (%p2478) target = $region104
        $region103: #{tpu_custom_call.1} parent=79 // pred_region
          %v2481 = vld [vmem:[%s13] sm:$0x1]
          %v2482 = vld [vmem:[%s14] sm:$0x1]
          %v2483 = vsel %vm744, %v2473, 0.0
          %2484 = vadd.xlane.f32.xlu0 %v2483
          %v2485 = vpop.xlane.xlu0 %2484
          %v2486 = vsel %vm744, %v2474, 0.0
          %2487 = vadd.xlane.f32.xlu0 %v2486
          %v2488 = vpop.xlane.xlu0 %2487
          %v2489 = vmul.f32 %v2485, %v757
          %v2490 = vmul.f32 %v2488, %v757
          %v2491 = vsub.f32 %v2473, %v2489
          %v2492 = vsub.f32 %v2474, %v2490
          %v2493 = vmul.f32 %v2491, %v2491
          %v2494 = vmul.f32 %v2492, %v2492
          %v2495 = vsel %vm744, %v2493, 0.0
          %2496 = vadd.xlane.f32.xlu0 %v2495
          %v2497 = vpop.xlane.xlu0 %2496
          %v2498 = vsel %vm744, %v2494, 0.0
          %2499 = vadd.xlane.f32.xlu0 %v2498
          %v2500 = vpop.xlane.xlu0 %2499
          %v2501 = vmul.f32 %v2497, %v757
          %v2502 = vmul.f32 %v2500, %v757
          %v2503 = vadd.f32 %v2501, 1e-05
          %v2504 = vadd.f32 %v2502, 1e-05
          %v2505 = vrsqrt.pop %v2503
          %v2506 = vmul.f32 %v2505, %v2503
          %v2507 = vmul.f32 %v2506, %v2505
          %v2508 = vmul.f32 0.5, %v2507
          %v2509 = vsub.f32 1.5, %v2508
          %v2510 = vmul.f32 %v2505, %v2509
          %vm2511 = vweird.f32 %v2503
          %vm2512 = vweird.f32 %v2505
          %vm2513 = vmor %vm2511, %vm2512
          %v2514 = vsel %vm2513, %v2505, %v2510
          %v2515 = vrsqrt.pop %v2504
          %v2516 = vmul.f32 %v2515, %v2504
          %v2517 = vmul.f32 %v2516, %v2515
          %v2518 = vmul.f32 0.5, %v2517
          %v2519 = vsub.f32 1.5, %v2518
          %v2520 = vmul.f32 %v2515, %v2519
          %vm2521 = vweird.f32 %v2504
          %vm2522 = vweird.f32 %v2515
          %vm2523 = vmor %vm2521, %vm2522
          %v2524 = vsel %vm2523, %v2515, %v2520
          %v2525 = vmul.f32 %v2491, %v2514
          %v2526 = vmul.f32 %v2492, %v2524
          %v2528 = vperm.slane %v2481, 0
          %v2530 = vmul.f32 %v2525, %v2528
          %v2531 = vmul.f32 %v2526, %v2528
          %v2533 = vperm.slane %v2482, 0
          %v2535 = vadd.f32 %v2530, %v2533
          %v2536 = vadd.f32 %v2531, %v2533
          %v2537 = vpack.c.bf16 %v2535, %v2535
          %v2538 = vpack.c.bf16 %v2536, %v2536
          %vm2539 = vcmask 257024
          %2540 = vst.msk [vmem:[#allocation11] sm:$0xf] %vm2539, %v2537
          %2541 = vst.msk [vmem:[#allocation11 + $0x4] sm:$0xf] %vm2539, %v2538
        $region104: #{tpu_custom_call.1} parent=79 // pred_fallthru
          _
        // Predicated region
        $region105: #{tpu_custom_call.1} parent=79 // pred_check
          %p2542 = pneg %p422
        $region106: #{tpu_custom_call.1} parent=79 // pred_check_branch
          %2544 = sbr.rel (%p2542) target = $region108
        $region107: #{tpu_custom_call.1} parent=79 // pred_region
          %2546 = vsyncadd [#allocation5], 0
          %s2547 = sshll.u32 [#allocation11], 4
          %s2548 = int_to_ptr.vmem [resolvable:$true] %s2547
          %s2549 = sshll.u32 %s15, 4
          %s2550 = int_to_ptr.hbm [resolvable:$true] %s2549
          %2555 = dma.vmem_to_hbm [thread:$0]  %s2548, 128, %s2550, [#allocation5], 64, 64, 4
        $region108: #{tpu_custom_call.1} parent=79 // pred_fallthru
          _
        // Predicated region
        $region109: #{tpu_custom_call.1} parent=79 // pred_check
          %p2556 = pneg %p422
        $region110: #{tpu_custom_call.1} parent=79 // pred_check_branch
          %2558 = sbr.rel (%p2556) target = $region112
        $region111: #{tpu_custom_call.1} parent=79 // pred_region
          %2560 = dma.done [#allocation5], 128
        $region112: #{tpu_custom_call.1} parent=79 // pred_fallthru
          _
      $region80: #{tpu_custom_call.1} parent=5 // pred_fallthru
        _
      %p2561 = scmp.le.s32.totalorder 2, %s29
      // Predicated region
      $region113: #{tpu_custom_call.1} parent=5 // pred_check
        %p2562 = pneg %p2561
      $region114: #{tpu_custom_call.1} parent=5 // pred_check_branch
        %2564 = sbr.rel (%p2562) target = $region116
      $region115: #{tpu_custom_call.1} parent=5 // pred_region
        %s2565 = ssub.s32 %s29, 2
      $region116: #{tpu_custom_call.1} parent=5 // pred_fallthru
        _
    $region6: #{tpu_custom_call.1} parent=1 // loop_footer
      %s33 = sadd.s32 1, %s29
    $region7: #{tpu_custom_call.1} parent=1 // loop_footer_branch
      %28 = sbr.rel target = $region3
    $region8: #{tpu_custom_call.1} parent=1 // loop_exit
      _
    %2566 = vsyncpa [#allocation4], 1
    %s2567 = scalar_lea.sflag [#allocation4], 1
    %2568 = vsyncpa %s2567, 1
    %2569 = vsyncpa [#allocation7], 1
    %s2570 = scalar_lea.sflag [#allocation7], 1
    %2571 = vsyncpa %s2570, 1
    %2572 = vsyncpa [#allocation10], 1
    %s2573 = scalar_lea.sflag [#allocation10], 1
    %2574 = vsyncpa %s2573, 1
    %2575 = vsyncpa [#allocation5], 1
    %s2576 = scalar_lea.sflag [#allocation5], 1
    %2577 = vsyncpa %s2576, 1

</llo_original>
